<compile_context>
chip_gen: v7x
topology: tpu7x:2x2x1
jax: 0.10.0
libtpu: 0.0.40
codegen_flags: <defaults>
</compile_context>

<pallas_src>
import jax
import jax.numpy as jnp
from jax import lax
from jax.experimental import pallas as pl
from jax.experimental.pallas import tpu as pltpu


def gru_kernel(gi_ref, whh_rz_ref, whh_n_ref, bhn_ref, h0_ref,
               out_ref, hN_ref, h_scr):
    tb = pl.program_id(1)

    @pl.when(tb == 0)
    def _init():
        h_scr[...] = h0_ref[...].astype(jnp.float32)

    t_blk, b_blk, Dp = out_ref.shape

    whh_rz = whh_rz_ref[...]                      # (Dp, 2Dp) bf16, VMEM-resident
    whh_n = whh_n_ref[...]                        # (Dp, Dp)  bf16, VMEM-resident
    # Hoist the bias broadcast out of the timestep loop (broadcasts are not CSE'd).
    bhn_b = jnp.broadcast_to(bhn_ref[...], (b_blk, Dp))   # (b_blk, Dp) f32

    def step(i, h):
        # bf16 stream -> f32 gate math (EUP/VPU path is f32 on all chips).
        gi = gi_ref[i].astype(jnp.float32)        # (b_blk, 3Dp)
        h_b = h.astype(jnp.bfloat16)
        # Two bf16 MXU dots, f32 accumulation; r/z gate math overlaps the n drain.
        gh_rz = jnp.dot(h_b, whh_rz, preferred_element_type=jnp.float32)
        gh_n = jnp.dot(h_b, whh_n, preferred_element_type=jnp.float32)
        # PyTorch gate order: r, z, n. (b_ih + b_hh for r/z already folded in gi.)
        r = jax.nn.sigmoid(gi[:, :Dp] + gh_rz[:, :Dp])
        z = jax.nn.sigmoid(gi[:, Dp:2 * Dp] + gh_rz[:, Dp:])
        n = jnp.tanh(gi[:, 2 * Dp:] + r * (gh_n + bhn_b))
        h = (1.0 - z) * n + z * h
        out_ref[i] = h.astype(out_ref.dtype)      # contiguous (sublane, lane) slab
        return h

    h = lax.fori_loop(0, t_blk, step, h_scr[...], unroll=min(t_blk, 8))
    h_scr[...] = h                                # carry across time-block steps

    @pl.when(tb == pl.num_programs(1) - 1)
    def _final():
        hN_ref[...] = h.astype(hN_ref.dtype)


def _round_up(x, m):
    return (x + m - 1) // m * m


def _pad_gate_mat(W, D, Dp):
    """(3D, D) torch-layout gate matrix -> (3Dp, Dp), zero-padded per gate."""
    Wp = jnp.zeros((3 * Dp, Dp), W.dtype)
    for g in range(3):
        Wp = Wp.at[g * Dp:g * Dp + D, :D].set(W[g * D:(g + 1) * D, :])
    return Wp


def _pad_gate_vec(b, D, Dp):
    """(3D,) gate bias -> (3Dp,), zero-padded per gate."""
    bp = jnp.zeros((3 * Dp,), b.dtype)
    for g in range(3):
        bp = bp.at[g * Dp:g * Dp + D].set(b[g * D:(g + 1) * D])
    return bp


def gru_forward(features, hiddens, W_ih, W_hh, b_ih, b_hh, *,
                t_blk=None, b_blk=None):
    """features: (B, T, D); hiddens: (1, B, D). Returns (out (B,T,D), h_n (1,B,D))."""
    B, T, D = features.shape
    dt = features.dtype

    # Lane/sublane alignment: D -> multiple of 128, B -> multiple of 8.
    Dp = _round_up(D, 128)
    Bp = _round_up(B, 8)

    # Padded, transposed weights. Recurrent weight stays bf16 (native MXU dtype).
    wih_t_p = jnp.transpose(_pad_gate_mat(W_ih.astype(jnp.float32), D, Dp))  # (Dp,3Dp)
    whh_t_p = jnp.transpose(_pad_gate_mat(W_hh.astype(jnp.float32), D, Dp))  # (Dp,3Dp)
    whh_rz = whh_t_p[:, :2 * Dp].astype(jnp.bfloat16)                        # (Dp,2Dp)
    whh_n = whh_t_p[:, 2 * Dp:].astype(jnp.bfloat16)                         # (Dp,Dp)

    # Fold b_hh's r/z parts into the hoisted input-projection bias; keep b_hn
    # separate (it lives inside r * (h @ W_hn^T + b_hn)).
    bias_fold = jnp.concatenate(
        [b_ih[:2 * D] + b_hh[:2 * D], b_ih[2 * D:]]).astype(jnp.float32)
    bias_fold_p = _pad_gate_vec(bias_fold, D, Dp)                            # (3Dp,)
    b_hn_p = jnp.zeros((1, Dp), jnp.float32).at[0, :D].set(
        b_hh[2 * D:].astype(jnp.float32))

    # Hoisted input projection for ALL timesteps (one big f32 matmul), then cast
    # the stream to bf16 — it is the dominant HBM read and the largest VMEM block.
    x_p = jnp.pad(features.astype(jnp.float32),
                  ((0, Bp - B), (0, 0), (0, Dp - D)))                        # (Bp,T,Dp)
    x_tm = jnp.transpose(x_p, (1, 0, 2)).reshape(T * Bp, Dp)                 # time-major
    gi = (jnp.dot(x_tm, wih_t_p) + bias_fold_p).reshape(T, Bp, 3 * Dp)
    gi = gi.astype(jnp.bfloat16)

    h0 = jnp.pad(hiddens[0].astype(jnp.float32),
                 ((0, Bp - B), (0, Dp - D)))                                 # (Bp,Dp)

    # Time-block size: largest divisor of T <= 32 (fori_loop -> no unroll blowup).
    if t_blk is None:
        t_blk = max(c for c in range(1, min(T, 32) + 1) if T % c == 0)
    n_tb = T // t_blk

    # Batch blocking: one block by default; set b_blk = Bp//2 (multiple of 8) to
    # split across v7x's two TensorCores via the "parallel" grid axis.
    if b_blk is None:
        b_blk = Bp
    n_bb = Bp // b_blk

    # Explicit VMEM budget (double-buffered streams + resident weights + state),
    # capped at 64 MiB so it also fits v7x.
    out_isz = jnp.dtype(dt).itemsize
    gi_blk_bytes = t_blk * b_blk * 3 * Dp * 2
    out_blk_bytes = t_blk * b_blk * Dp * out_isz
    const_bytes = 3 * Dp * Dp * 2 + Dp * 4
    state_bytes = 3 * b_blk * Dp * 4
    est = 2 * (gi_blk_bytes + out_blk_bytes) + const_bytes + 2 * state_bytes
    vmem_limit = int(min(max(2 * est, 32 << 20) + (2 << 20), 64 << 20))

    out_tm, h_n = pl.pallas_call(
        gru_kernel,
        out_shape=(jax.ShapeDtypeStruct((T, Bp, Dp), dt),
                   jax.ShapeDtypeStruct((Bp, Dp), dt)),
        grid_spec=pltpu.PrefetchScalarGridSpec(
            num_scalar_prefetch=0,
            grid=(n_bb, n_tb),                                   # (batch, time)
            in_specs=[
                pl.BlockSpec((t_blk, b_blk, 3 * Dp),
                             lambda bb, tb: (tb, bb, 0)),        # gi stream (bf16)
                pl.BlockSpec((Dp, 2 * Dp), lambda bb, tb: (0, 0),
                             pipeline_mode=pl.Buffered(1)),      # W_hh^T (r,z)
                pl.BlockSpec((Dp, Dp), lambda bb, tb: (0, 0),
                             pipeline_mode=pl.Buffered(1)),      # W_hh^T (n)
                pl.BlockSpec((1, Dp), lambda bb, tb: (0, 0),
                             pipeline_mode=pl.Buffered(1)),      # b_hn
                pl.BlockSpec((b_blk, Dp), lambda bb, tb: (bb, 0)),  # h0
            ],
            out_specs=(
                pl.BlockSpec((t_blk, b_blk, Dp),
                             lambda bb, tb: (tb, bb, 0)),        # out (time-major)
                pl.BlockSpec((b_blk, Dp), lambda bb, tb: (bb, 0)),  # final hidden
            ),
            scratch_shapes=[pltpu.VMEM((b_blk, Dp), jnp.float32)],
        ),
        compiler_params=pltpu.CompilerParams(
            dimension_semantics=("parallel", "arbitrary"),       # time is sequential
            vmem_limit_bytes=vmem_limit),
    )(gi, whh_rz, whh_n, b_hn_p, h0)

    out = jnp.transpose(out_tm, (1, 0, 2))[:B, :, :D]            # (B, T, D)
    return out, h_n[:B, :D][None]                                # (1, B, D)


def gru_reference(features, hiddens, W_ih, W_hh, b_ih, b_hh):
    """Pure-JAX reference replicating torch.nn.GRU (1 layer, batch_first)."""
    D = features.shape[-1]

    def step(h, x):
        gi = x @ W_ih.T + b_ih
        gh = h @ W_hh.T + b_hh
        r = jax.nn.sigmoid(gi[:, :D] + gh[:, :D])
        z = jax.nn.sigmoid(gi[:, D:2 * D] + gh[:, D:2 * D])
        n = jnp.tanh(gi[:, 2 * D:] + r * gh[:, 2 * D:])
        h_new = (1.0 - z) * n + z * h
        return h_new, h_new

    h_last, outs = jax.lax.scan(step, hiddens[0],
                                jnp.transpose(features, (1, 0, 2)))
    return jnp.transpose(outs, (1, 0, 2)), h_last[None]


if __name__ == "__main__":
    B, T, dim = 2, 8, 32
    drop_prob = 0.1  # nn.GRU dropout is a no-op with num_layers=1 (forward pass)

    key = jax.random.PRNGKey(0)
    kx, kh, k1, k2, k3, k4 = jax.random.split(key, 6)

    features = jax.random.normal(kx, (B, T, dim), dtype=jnp.float32)
    hiddens = jax.random.normal(kh, (1, B, dim), dtype=jnp.float32)

    # nn.GRU parameter shapes (num_layers=1): weight_ih_l0 (3*dim, dim),
    # weight_hh_l0 (3*dim, dim), bias_ih_l0 (3*dim,), bias_hh_l0 (3*dim,)
    scale = 1.0 / jnp.sqrt(dim)
    W_ih = jax.random.uniform(k1, (3 * dim, dim), jnp.float32, -scale, scale)
    W_hh = jax.random.uniform(k2, (3 * dim, dim), jnp.float32, -scale, scale)
    b_ih = jax.random.uniform(k3, (3 * dim,), jnp.float32, -scale, scale)
    b_hh = jax.random.uniform(k4, (3 * dim,), jnp.float32, -scale, scale)

    out, h_n = gru_forward(features, hiddens, W_ih, W_hh, b_ih, b_hh)
    out = jax.block_until_ready(out)
    h_n = jax.block_until_ready(h_n)

    out_ref, h_ref = gru_reference(features, hiddens, W_ih, W_hh, b_ih, b_hh)
    assert out.shape == (B, T, dim) and h_n.shape == (1, B, dim)
    # bf16 gi stream / bf16 W_hh with f32 accumulation & carry -> relaxed tolerance.
    assert jnp.allclose(out, out_ref, atol=2.5e-2, rtol=2.5e-2)
    assert jnp.allclose(h_n, h_ref, atol=2.5e-2, rtol=2.5e-2)

    print("KERNEL_OK")
</pallas_src>

<mosaic_0001>
module attributes {stable_mosaic.version = 11 : i64} {
  func.func @gru_kernel(%arg0: i32, %arg1: i32, %arg2: memref<8x8x384xbf16, #tpu.memory_space<vmem>>, %arg3: memref<128x256xbf16, #tpu.memory_space<vmem>>, %arg4: memref<128x128xbf16, #tpu.memory_space<vmem>>, %arg5: memref<1x128xf32, #tpu.memory_space<vmem>>, %arg6: memref<8x128xf32, #tpu.memory_space<vmem>>, %arg7: memref<8x8x128xf32, #tpu.memory_space<vmem>>, %arg8: memref<8x128xf32, #tpu.memory_space<vmem>>, %arg9: memref<8x128xf32, #tpu.memory_space<vmem>>) attributes {dimension_semantics = [#tpu.dimension_semantics<parallel>, #tpu.dimension_semantics<arbitrary>], iteration_bounds = array<i64: 1, 1>, scalar_prefetch = 0 : i64, scratch_operands = 1 : i64, tpu.core_type = #tpu.core_type<tc>, window_params = [{transform_indices = @transform_0, window_bounds = array<i64: 8, 8, 384>}, {pipeline_mode = #tpu.pipeline_mode<synchronous>, transform_indices = @transform_1, window_bounds = array<i64: 128, 256>}, {pipeline_mode = #tpu.pipeline_mode<synchronous>, transform_indices = @transform_2, window_bounds = array<i64: 128, 128>}, {pipeline_mode = #tpu.pipeline_mode<synchronous>, transform_indices = @transform_3, window_bounds = array<i64: 1, 128>}, {transform_indices = @transform_4, window_bounds = array<i64: 8, 128>}, {transform_indices = @transform_5, window_bounds = array<i64: 8, 8, 128>}, {transform_indices = @transform_6, window_bounds = array<i64: 8, 128>}]} {
    %c0_i32 = arith.constant 0 : i32
    %0 = arith.cmpi eq, %arg1, %c0_i32 : i32
    %1 = arith.extui %0 : i1 to i32
    %c0_i32_0 = arith.constant 0 : i32
    %2 = arith.cmpi ne, %1, %c0_i32_0 : i32
    scf.if %2 {
      %c0_84 = arith.constant 0 : index
      %c0_85 = arith.constant 0 : index
      %309 = vector.load %arg6[%c0_84, %c0_85] : memref<8x128xf32, #tpu.memory_space<vmem>>, vector<8x128xf32>
      %c0_86 = arith.constant 0 : index
      %c0_87 = arith.constant 0 : index
      %310 = vector.load %arg9[%c0_86, %c0_87] : memref<8x128xf32, #tpu.memory_space<vmem>>, vector<8x128xf32>
      tpu.vector_store %arg9[%c0_86, %c0_87], %309 {strides = array<i32>} : memref<8x128xf32, #tpu.memory_space<vmem>>, vector<8x128xf32>,
    } else {
    }
    %c0 = arith.constant 0 : index
    %c0_1 = arith.constant 0 : index
    %3 = vector.load %arg3[%c0, %c0_1] : memref<128x256xbf16, #tpu.memory_space<vmem>>, vector<128x256xbf16>
    %c0_2 = arith.constant 0 : index
    %c0_3 = arith.constant 0 : index
    %4 = vector.load %arg4[%c0_2, %c0_3] : memref<128x128xbf16, #tpu.memory_space<vmem>>, vector<128x128xbf16>
    %c0_4 = arith.constant 0 : index
    %c0_5 = arith.constant 0 : index
    %5 = vector.load %arg5[%c0_4, %c0_5] : memref<1x128xf32, #tpu.memory_space<vmem>>, vector<1x128xf32>
    %6 = vector.shape_cast %5 : vector<1x128xf32> to vector<1x128xf32>
    %7 = vector.broadcast %6 : vector<1x128xf32> to vector<8x128xf32>
    %c0_6 = arith.constant 0 : index
    %c0_7 = arith.constant 0 : index
    %8 = vector.load %arg9[%c0_6, %c0_7] : memref<8x128xf32, #tpu.memory_space<vmem>>, vector<8x128xf32>
    %c0_i32_8 = arith.constant 0 : i32
    %9 = arith.index_cast %c0_i32_8 : i32 to index
    %c0_9 = arith.constant 0 : index
    %c0_10 = arith.constant 0 : index
    %10 = vector.load %arg2[%9, %c0_9, %c0_10] : memref<8x8x384xbf16, #tpu.memory_space<vmem>>, vector<1x8x384xbf16>
    %11 = vector.shape_cast %10 : vector<1x8x384xbf16> to vector<8x384xbf16>
    %12 = arith.extf %11 : vector<8x384xbf16> to vector<8x384xf32>
    %13 = arith.truncf %8 : vector<8x128xf32> to vector<8x128xbf16>
    %cst = arith.constant dense<0.000000e+00> : vector<8x256xf32>
    %14 = tpu.matmul %13, %3, %cst {dimension_numbers = #tpu.dot_dimension_numbers<[1], [0], [0], [1], [0, 0, 1, 1], [], []>} : vector<8x128xbf16>, vector<128x256xbf16>, vector<8x256xf32> -> vector<8x256xf32>
    %cst_11 = arith.constant dense<0.000000e+00> : vector<8x128xf32>
    %15 = tpu.matmul %13, %4, %cst_11 {dimension_numbers = #tpu.dot_dimension_numbers<[1], [0], [0], [1], [0, 0, 1, 1], [], []>} : vector<8x128xbf16>, vector<128x128xbf16>, vector<8x128xf32> -> vector<8x128xf32>
    %16 = vector.extract_strided_slice %12 {offsets = [0, 0], sizes = [8, 128], strides = [1, 1]} : vector<8x384xf32> to vector<8x128xf32>
    %17 = vector.extract_strided_slice %14 {offsets = [0, 0], sizes = [8, 128], strides = [1, 1]} : vector<8x256xf32> to vector<8x128xf32>
    %18 = arith.addf %16, %17 : vector<8x128xf32>
    %19 = arith.negf %18 : vector<8x128xf32>
    %20 = math.exp %19 : vector<8x128xf32>
    %cst_12 = arith.constant 1.000000e+00 : f32
    %21 = vector.broadcast %cst_12 : f32 to vector<8x128xf32>
    %22 = arith.addf %21, %20 : vector<8x128xf32>
    %23 = arith.divf %21, %22 : vector<8x128xf32>
    %24 = vector.extract_strided_slice %12 {offsets = [0, 128], sizes = [8, 128], strides = [1, 1]} : vector<8x384xf32> to vector<8x128xf32>
    %25 = vector.extract_strided_slice %14 {offsets = [0, 128], sizes = [8, 128], strides = [1, 1]} : vector<8x256xf32> to vector<8x128xf32>
    %26 = arith.addf %24, %25 : vector<8x128xf32>
    %27 = arith.negf %26 : vector<8x128xf32>
    %28 = math.exp %27 : vector<8x128xf32>
    %cst_13 = arith.constant 1.000000e+00 : f32
    %29 = vector.broadcast %cst_13 : f32 to vector<8x128xf32>
    %30 = arith.addf %29, %28 : vector<8x128xf32>
    %31 = arith.divf %29, %30 : vector<8x128xf32>
    %32 = vector.extract_strided_slice %12 {offsets = [0, 256], sizes = [8, 128], strides = [1, 1]} : vector<8x384xf32> to vector<8x128xf32>
    %33 = arith.addf %15, %7 : vector<8x128xf32>
    %34 = arith.mulf %23, %33 : vector<8x128xf32>
    %35 = arith.addf %32, %34 : vector<8x128xf32>
    %36 = math.tanh %35 : vector<8x128xf32>
    %cst_14 = arith.constant 1.000000e+00 : f32
    %37 = vector.broadcast %cst_14 : f32 to vector<8x128xf32>
    %38 = arith.subf %37, %31 : vector<8x128xf32>
    %39 = arith.mulf %38, %36 : vector<8x128xf32>
    %40 = arith.mulf %31, %8 : vector<8x128xf32>
    %41 = arith.addf %39, %40 : vector<8x128xf32>
    %42 = arith.index_cast %c0_i32_8 : i32 to index
    %c0_15 = arith.constant 0 : index
    %c0_16 = arith.constant 0 : index
    %43 = vector.load %arg7[%42, %c0_15, %c0_16] : memref<8x8x128xf32, #tpu.memory_space<vmem>>, vector<1x8x128xf32>
    %44 = vector.shape_cast %43 : vector<1x8x128xf32> to vector<8x128xf32>
    %45 = vector.shape_cast %41 : vector<8x128xf32> to vector<1x8x128xf32>
    tpu.vector_store %arg7[%42, %c0_15, %c0_16], %45 {strides = array<i32>} : memref<8x8x128xf32, #tpu.memory_space<vmem>>, vector<1x8x128xf32>,
    %c1_i32 = arith.constant 1 : i32
    %46 = arith.index_cast %c1_i32 : i32 to index
    %c0_17 = arith.constant 0 : index
    %c0_18 = arith.constant 0 : index
    %47 = vector.load %arg2[%46, %c0_17, %c0_18] : memref<8x8x384xbf16, #tpu.memory_space<vmem>>, vector<1x8x384xbf16>
    %48 = vector.shape_cast %47 : vector<1x8x384xbf16> to vector<8x384xbf16>
    %49 = arith.extf %48 : vector<8x384xbf16> to vector<8x384xf32>
    %50 = arith.truncf %41 : vector<8x128xf32> to vector<8x128xbf16>
    %cst_19 = arith.constant dense<0.000000e+00> : vector<8x256xf32>
    %51 = tpu.matmul %50, %3, %cst_19 {dimension_numbers = #tpu.dot_dimension_numbers<[1], [0], [0], [1], [0, 0, 1, 1], [], []>} : vector<8x128xbf16>, vector<128x256xbf16>, vector<8x256xf32> -> vector<8x256xf32>
    %cst_20 = arith.constant dense<0.000000e+00> : vector<8x128xf32>
    %52 = tpu.matmul %50, %4, %cst_20 {dimension_numbers = #tpu.dot_dimension_numbers<[1], [0], [0], [1], [0, 0, 1, 1], [], []>} : vector<8x128xbf16>, vector<128x128xbf16>, vector<8x128xf32> -> vector<8x128xf32>
    %53 = vector.extract_strided_slice %49 {offsets = [0, 0], sizes = [8, 128], strides = [1, 1]} : vector<8x384xf32> to vector<8x128xf32>
    %54 = vector.extract_strided_slice %51 {offsets = [0, 0], sizes = [8, 128], strides = [1, 1]} : vector<8x256xf32> to vector<8x128xf32>
    %55 = arith.addf %53, %54 : vector<8x128xf32>
    %56 = arith.negf %55 : vector<8x128xf32>
    %57 = math.exp %56 : vector<8x128xf32>
    %cst_21 = arith.constant 1.000000e+00 : f32
    %58 = vector.broadcast %cst_21 : f32 to vector<8x128xf32>
    %59 = arith.addf %58, %57 : vector<8x128xf32>
    %60 = arith.divf %58, %59 : vector<8x128xf32>
    %61 = vector.extract_strided_slice %49 {offsets = [0, 128], sizes = [8, 128], strides = [1, 1]} : vector<8x384xf32> to vector<8x128xf32>
    %62 = vector.extract_strided_slice %51 {offsets = [0, 128], sizes = [8, 128], strides = [1, 1]} : vector<8x256xf32> to vector<8x128xf32>
    %63 = arith.addf %61, %62 : vector<8x128xf32>
    %64 = arith.negf %63 : vector<8x128xf32>
    %65 = math.exp %64 : vector<8x128xf32>
    %cst_22 = arith.constant 1.000000e+00 : f32
    %66 = vector.broadcast %cst_22 : f32 to vector<8x128xf32>
    %67 = arith.addf %66, %65 : vector<8x128xf32>
    %68 = arith.divf %66, %67 : vector<8x128xf32>
    %69 = vector.extract_strided_slice %49 {offsets = [0, 256], sizes = [8, 128], strides = [1, 1]} : vector<8x384xf32> to vector<8x128xf32>
    %70 = arith.addf %52, %7 : vector<8x128xf32>
    %71 = arith.mulf %60, %70 : vector<8x128xf32>
    %72 = arith.addf %69, %71 : vector<8x128xf32>
    %73 = math.tanh %72 : vector<8x128xf32>
    %cst_23 = arith.constant 1.000000e+00 : f32
    %74 = vector.broadcast %cst_23 : f32 to vector<8x128xf32>
    %75 = arith.subf %74, %68 : vector<8x128xf32>
    %76 = arith.mulf %75, %73 : vector<8x128xf32>
    %77 = arith.mulf %68, %41 : vector<8x128xf32>
    %78 = arith.addf %76, %77 : vector<8x128xf32>
    %79 = arith.index_cast %c1_i32 : i32 to index
    %c0_24 = arith.constant 0 : index
    %c0_25 = arith.constant 0 : index
    %80 = vector.load %arg7[%79, %c0_24, %c0_25] : memref<8x8x128xf32, #tpu.memory_space<vmem>>, vector<1x8x128xf32>
    %81 = vector.shape_cast %80 : vector<1x8x128xf32> to vector<8x128xf32>
    %82 = vector.shape_cast %78 : vector<8x128xf32> to vector<1x8x128xf32>
    tpu.vector_store %arg7[%79, %c0_24, %c0_25], %82 {strides = array<i32>} : memref<8x8x128xf32, #tpu.memory_space<vmem>>, vector<1x8x128xf32>,
    %c2_i32 = arith.constant 2 : i32
    %83 = arith.index_cast %c2_i32 : i32 to index
    %c0_26 = arith.constant 0 : index
    %c0_27 = arith.constant 0 : index
    %84 = vector.load %arg2[%83, %c0_26, %c0_27] : memref<8x8x384xbf16, #tpu.memory_space<vmem>>, vector<1x8x384xbf16>
    %85 = vector.shape_cast %84 : vector<1x8x384xbf16> to vector<8x384xbf16>
    %86 = arith.extf %85 : vector<8x384xbf16> to vector<8x384xf32>
    %87 = arith.truncf %78 : vector<8x128xf32> to vector<8x128xbf16>
    %cst_28 = arith.constant dense<0.000000e+00> : vector<8x256xf32>
    %88 = tpu.matmul %87, %3, %cst_28 {dimension_numbers = #tpu.dot_dimension_numbers<[1], [0], [0], [1], [0, 0, 1, 1], [], []>} : vector<8x128xbf16>, vector<128x256xbf16>, vector<8x256xf32> -> vector<8x256xf32>
    %cst_29 = arith.constant dense<0.000000e+00> : vector<8x128xf32>
    %89 = tpu.matmul %87, %4, %cst_29 {dimension_numbers = #tpu.dot_dimension_numbers<[1], [0], [0], [1], [0, 0, 1, 1], [], []>} : vector<8x128xbf16>, vector<128x128xbf16>, vector<8x128xf32> -> vector<8x128xf32>
    %90 = vector.extract_strided_slice %86 {offsets = [0, 0], sizes = [8, 128], strides = [1, 1]} : vector<8x384xf32> to vector<8x128xf32>
    %91 = vector.extract_strided_slice %88 {offsets = [0, 0], sizes = [8, 128], strides = [1, 1]} : vector<8x256xf32> to vector<8x128xf32>
    %92 = arith.addf %90, %91 : vector<8x128xf32>
    %93 = arith.negf %92 : vector<8x128xf32>
    %94 = math.exp %93 : vector<8x128xf32>
    %cst_30 = arith.constant 1.000000e+00 : f32
    %95 = vector.broadcast %cst_30 : f32 to vector<8x128xf32>
    %96 = arith.addf %95, %94 : vector<8x128xf32>
    %97 = arith.divf %95, %96 : vector<8x128xf32>
    %98 = vector.extract_strided_slice %86 {offsets = [0, 128], sizes = [8, 128], strides = [1, 1]} : vector<8x384xf32> to vector<8x128xf32>
    %99 = vector.extract_strided_slice %88 {offsets = [0, 128], sizes = [8, 128], strides = [1, 1]} : vector<8x256xf32> to vector<8x128xf32>
    %100 = arith.addf %98, %99 : vector<8x128xf32>
    %101 = arith.negf %100 : vector<8x128xf32>
    %102 = math.exp %101 : vector<8x128xf32>
    %cst_31 = arith.constant 1.000000e+00 : f32
    %103 = vector.broadcast %cst_31 : f32 to vector<8x128xf32>
    %104 = arith.addf %103, %102 : vector<8x128xf32>
    %105 = arith.divf %103, %104 : vector<8x128xf32>
    %106 = vector.extract_strided_slice %86 {offsets = [0, 256], sizes = [8, 128], strides = [1, 1]} : vector<8x384xf32> to vector<8x128xf32>
    %107 = arith.addf %89, %7 : vector<8x128xf32>
    %108 = arith.mulf %97, %107 : vector<8x128xf32>
    %109 = arith.addf %106, %108 : vector<8x128xf32>
    %110 = math.tanh %109 : vector<8x128xf32>
    %cst_32 = arith.constant 1.000000e+00 : f32
    %111 = vector.broadcast %cst_32 : f32 to vector<8x128xf32>
    %112 = arith.subf %111, %105 : vector<8x128xf32>
    %113 = arith.mulf %112, %110 : vector<8x128xf32>
    %114 = arith.mulf %105, %78 : vector<8x128xf32>
    %115 = arith.addf %113, %114 : vector<8x128xf32>
    %116 = arith.index_cast %c2_i32 : i32 to index
    %c0_33 = arith.constant 0 : index
    %c0_34 = arith.constant 0 : index
    %117 = vector.load %arg7[%116, %c0_33, %c0_34] : memref<8x8x128xf32, #tpu.memory_space<vmem>>, vector<1x8x128xf32>
    %118 = vector.shape_cast %117 : vector<1x8x128xf32> to vector<8x128xf32>
    %119 = vector.shape_cast %115 : vector<8x128xf32> to vector<1x8x128xf32>
    tpu.vector_store %arg7[%116, %c0_33, %c0_34], %119 {strides = array<i32>} : memref<8x8x128xf32, #tpu.memory_space<vmem>>, vector<1x8x128xf32>,
    %c3_i32 = arith.constant 3 : i32
    %120 = arith.index_cast %c3_i32 : i32 to index
    %c0_35 = arith.constant 0 : index
    %c0_36 = arith.constant 0 : index
    %121 = vector.load %arg2[%120, %c0_35, %c0_36] : memref<8x8x384xbf16, #tpu.memory_space<vmem>>, vector<1x8x384xbf16>
    %122 = vector.shape_cast %121 : vector<1x8x384xbf16> to vector<8x384xbf16>
    %123 = arith.extf %122 : vector<8x384xbf16> to vector<8x384xf32>
    %124 = arith.truncf %115 : vector<8x128xf32> to vector<8x128xbf16>
    %cst_37 = arith.constant dense<0.000000e+00> : vector<8x256xf32>
    %125 = tpu.matmul %124, %3, %cst_37 {dimension_numbers = #tpu.dot_dimension_numbers<[1], [0], [0], [1], [0, 0, 1, 1], [], []>} : vector<8x128xbf16>, vector<128x256xbf16>, vector<8x256xf32> -> vector<8x256xf32>
    %cst_38 = arith.constant dense<0.000000e+00> : vector<8x128xf32>
    %126 = tpu.matmul %124, %4, %cst_38 {dimension_numbers = #tpu.dot_dimension_numbers<[1], [0], [0], [1], [0, 0, 1, 1], [], []>} : vector<8x128xbf16>, vector<128x128xbf16>, vector<8x128xf32> -> vector<8x128xf32>
    %127 = vector.extract_strided_slice %123 {offsets = [0, 0], sizes = [8, 128], strides = [1, 1]} : vector<8x384xf32> to vector<8x128xf32>
    %128 = vector.extract_strided_slice %125 {offsets = [0, 0], sizes = [8, 128], strides = [1, 1]} : vector<8x256xf32> to vector<8x128xf32>
    %129 = arith.addf %127, %128 : vector<8x128xf32>
    %130 = arith.negf %129 : vector<8x128xf32>
    %131 = math.exp %130 : vector<8x128xf32>
    %cst_39 = arith.constant 1.000000e+00 : f32
    %132 = vector.broadcast %cst_39 : f32 to vector<8x128xf32>
    %133 = arith.addf %132, %131 : vector<8x128xf32>
    %134 = arith.divf %132, %133 : vector<8x128xf32>
    %135 = vector.extract_strided_slice %123 {offsets = [0, 128], sizes = [8, 128], strides = [1, 1]} : vector<8x384xf32> to vector<8x128xf32>
    %136 = vector.extract_strided_slice %125 {offsets = [0, 128], sizes = [8, 128], strides = [1, 1]} : vector<8x256xf32> to vector<8x128xf32>
    %137 = arith.addf %135, %136 : vector<8x128xf32>
    %138 = arith.negf %137 : vector<8x128xf32>
    %139 = math.exp %138 : vector<8x128xf32>
    %cst_40 = arith.constant 1.000000e+00 : f32
    %140 = vector.broadcast %cst_40 : f32 to vector<8x128xf32>
    %141 = arith.addf %140, %139 : vector<8x128xf32>
    %142 = arith.divf %140, %141 : vector<8x128xf32>
    %143 = vector.extract_strided_slice %123 {offsets = [0, 256], sizes = [8, 128], strides = [1, 1]} : vector<8x384xf32> to vector<8x128xf32>
    %144 = arith.addf %126, %7 : vector<8x128xf32>
    %145 = arith.mulf %134, %144 : vector<8x128xf32>
    %146 = arith.addf %143, %145 : vector<8x128xf32>
    %147 = math.tanh %146 : vector<8x128xf32>
    %cst_41 = arith.constant 1.000000e+00 : f32
    %148 = vector.broadcast %cst_41 : f32 to vector<8x128xf32>
    %149 = arith.subf %148, %142 : vector<8x128xf32>
    %150 = arith.mulf %149, %147 : vector<8x128xf32>
    %151 = arith.mulf %142, %115 : vector<8x128xf32>
    %152 = arith.addf %150, %151 : vector<8x128xf32>
    %153 = arith.index_cast %c3_i32 : i32 to index
    %c0_42 = arith.constant 0 : index
    %c0_43 = arith.constant 0 : index
    %154 = vector.load %arg7[%153, %c0_42, %c0_43] : memref<8x8x128xf32, #tpu.memory_space<vmem>>, vector<1x8x128xf32>
    %155 = vector.shape_cast %154 : vector<1x8x128xf32> to vector<8x128xf32>
    %156 = vector.shape_cast %152 : vector<8x128xf32> to vector<1x8x128xf32>
    tpu.vector_store %arg7[%153, %c0_42, %c0_43], %156 {strides = array<i32>} : memref<8x8x128xf32, #tpu.memory_space<vmem>>, vector<1x8x128xf32>,
    %c4_i32 = arith.constant 4 : i32
    %157 = arith.index_cast %c4_i32 : i32 to index
    %c0_44 = arith.constant 0 : index
    %c0_45 = arith.constant 0 : index
    %158 = vector.load %arg2[%157, %c0_44, %c0_45] : memref<8x8x384xbf16, #tpu.memory_space<vmem>>, vector<1x8x384xbf16>
    %159 = vector.shape_cast %158 : vector<1x8x384xbf16> to vector<8x384xbf16>
    %160 = arith.extf %159 : vector<8x384xbf16> to vector<8x384xf32>
    %161 = arith.truncf %152 : vector<8x128xf32> to vector<8x128xbf16>
    %cst_46 = arith.constant dense<0.000000e+00> : vector<8x256xf32>
    %162 = tpu.matmul %161, %3, %cst_46 {dimension_numbers = #tpu.dot_dimension_numbers<[1], [0], [0], [1], [0, 0, 1, 1], [], []>} : vector<8x128xbf16>, vector<128x256xbf16>, vector<8x256xf32> -> vector<8x256xf32>
    %cst_47 = arith.constant dense<0.000000e+00> : vector<8x128xf32>
    %163 = tpu.matmul %161, %4, %cst_47 {dimension_numbers = #tpu.dot_dimension_numbers<[1], [0], [0], [1], [0, 0, 1, 1], [], []>} : vector<8x128xbf16>, vector<128x128xbf16>, vector<8x128xf32> -> vector<8x128xf32>
    %164 = vector.extract_strided_slice %160 {offsets = [0, 0], sizes = [8, 128], strides = [1, 1]} : vector<8x384xf32> to vector<8x128xf32>
    %165 = vector.extract_strided_slice %162 {offsets = [0, 0], sizes = [8, 128], strides = [1, 1]} : vector<8x256xf32> to vector<8x128xf32>
    %166 = arith.addf %164, %165 : vector<8x128xf32>
    %167 = arith.negf %166 : vector<8x128xf32>
    %168 = math.exp %167 : vector<8x128xf32>
    %cst_48 = arith.constant 1.000000e+00 : f32
    %169 = vector.broadcast %cst_48 : f32 to vector<8x128xf32>
    %170 = arith.addf %169, %168 : vector<8x128xf32>
    %171 = arith.divf %169, %170 : vector<8x128xf32>
    %172 = vector.extract_strided_slice %160 {offsets = [0, 128], sizes = [8, 128], strides = [1, 1]} : vector<8x384xf32> to vector<8x128xf32>
    %173 = vector.extract_strided_slice %162 {offsets = [0, 128], sizes = [8, 128], strides = [1, 1]} : vector<8x256xf32> to vector<8x128xf32>
    %174 = arith.addf %172, %173 : vector<8x128xf32>
    %175 = arith.negf %174 : vector<8x128xf32>
    %176 = math.exp %175 : vector<8x128xf32>
    %cst_49 = arith.constant 1.000000e+00 : f32
    %177 = vector.broadcast %cst_49 : f32 to vector<8x128xf32>
    %178 = arith.addf %177, %176 : vector<8x128xf32>
    %179 = arith.divf %177, %178 : vector<8x128xf32>
    %180 = vector.extract_strided_slice %160 {offsets = [0, 256], sizes = [8, 128], strides = [1, 1]} : vector<8x384xf32> to vector<8x128xf32>
    %181 = arith.addf %163, %7 : vector<8x128xf32>
    %182 = arith.mulf %171, %181 : vector<8x128xf32>
    %183 = arith.addf %180, %182 : vector<8x128xf32>
    %184 = math.tanh %183 : vector<8x128xf32>
    %cst_50 = arith.constant 1.000000e+00 : f32
    %185 = vector.broadcast %cst_50 : f32 to vector<8x128xf32>
    %186 = arith.subf %185, %179 : vector<8x128xf32>
    %187 = arith.mulf %186, %184 : vector<8x128xf32>
    %188 = arith.mulf %179, %152 : vector<8x128xf32>
    %189 = arith.addf %187, %188 : vector<8x128xf32>
    %190 = arith.index_cast %c4_i32 : i32 to index
    %c0_51 = arith.constant 0 : index
    %c0_52 = arith.constant 0 : index
    %191 = vector.load %arg7[%190, %c0_51, %c0_52] : memref<8x8x128xf32, #tpu.memory_space<vmem>>, vector<1x8x128xf32>
    %192 = vector.shape_cast %191 : vector<1x8x128xf32> to vector<8x128xf32>
    %193 = vector.shape_cast %189 : vector<8x128xf32> to vector<1x8x128xf32>
    tpu.vector_store %arg7[%190, %c0_51, %c0_52], %193 {strides = array<i32>} : memref<8x8x128xf32, #tpu.memory_space<vmem>>, vector<1x8x128xf32>,
    %c5_i32 = arith.constant 5 : i32
    %194 = arith.index_cast %c5_i32 : i32 to index
    %c0_53 = arith.constant 0 : index
    %c0_54 = arith.constant 0 : index
    %195 = vector.load %arg2[%194, %c0_53, %c0_54] : memref<8x8x384xbf16, #tpu.memory_space<vmem>>, vector<1x8x384xbf16>
    %196 = vector.shape_cast %195 : vector<1x8x384xbf16> to vector<8x384xbf16>
    %197 = arith.extf %196 : vector<8x384xbf16> to vector<8x384xf32>
    %198 = arith.truncf %189 : vector<8x128xf32> to vector<8x128xbf16>
    %cst_55 = arith.constant dense<0.000000e+00> : vector<8x256xf32>
    %199 = tpu.matmul %198, %3, %cst_55 {dimension_numbers = #tpu.dot_dimension_numbers<[1], [0], [0], [1], [0, 0, 1, 1], [], []>} : vector<8x128xbf16>, vector<128x256xbf16>, vector<8x256xf32> -> vector<8x256xf32>
    %cst_56 = arith.constant dense<0.000000e+00> : vector<8x128xf32>
    %200 = tpu.matmul %198, %4, %cst_56 {dimension_numbers = #tpu.dot_dimension_numbers<[1], [0], [0], [1], [0, 0, 1, 1], [], []>} : vector<8x128xbf16>, vector<128x128xbf16>, vector<8x128xf32> -> vector<8x128xf32>
    %201 = vector.extract_strided_slice %197 {offsets = [0, 0], sizes = [8, 128], strides = [1, 1]} : vector<8x384xf32> to vector<8x128xf32>
    %202 = vector.extract_strided_slice %199 {offsets = [0, 0], sizes = [8, 128], strides = [1, 1]} : vector<8x256xf32> to vector<8x128xf32>
    %203 = arith.addf %201, %202 : vector<8x128xf32>
    %204 = arith.negf %203 : vector<8x128xf32>
    %205 = math.exp %204 : vector<8x128xf32>
    %cst_57 = arith.constant 1.000000e+00 : f32
    %206 = vector.broadcast %cst_57 : f32 to vector<8x128xf32>
    %207 = arith.addf %206, %205 : vector<8x128xf32>
    %208 = arith.divf %206, %207 : vector<8x128xf32>
    %209 = vector.extract_strided_slice %197 {offsets = [0, 128], sizes = [8, 128], strides = [1, 1]} : vector<8x384xf32> to vector<8x128xf32>
    %210 = vector.extract_strided_slice %199 {offsets = [0, 128], sizes = [8, 128], strides = [1, 1]} : vector<8x256xf32> to vector<8x128xf32>
    %211 = arith.addf %209, %210 : vector<8x128xf32>
    %212 = arith.negf %211 : vector<8x128xf32>
    %213 = math.exp %212 : vector<8x128xf32>
    %cst_58 = arith.constant 1.000000e+00 : f32
    %214 = vector.broadcast %cst_58 : f32 to vector<8x128xf32>
    %215 = arith.addf %214, %213 : vector<8x128xf32>
    %216 = arith.divf %214, %215 : vector<8x128xf32>
    %217 = vector.extract_strided_slice %197 {offsets = [0, 256], sizes = [8, 128], strides = [1, 1]} : vector<8x384xf32> to vector<8x128xf32>
    %218 = arith.addf %200, %7 : vector<8x128xf32>
    %219 = arith.mulf %208, %218 : vector<8x128xf32>
    %220 = arith.addf %217, %219 : vector<8x128xf32>
    %221 = math.tanh %220 : vector<8x128xf32>
    %cst_59 = arith.constant 1.000000e+00 : f32
    %222 = vector.broadcast %cst_59 : f32 to vector<8x128xf32>
    %223 = arith.subf %222, %216 : vector<8x128xf32>
    %224 = arith.mulf %223, %221 : vector<8x128xf32>
    %225 = arith.mulf %216, %189 : vector<8x128xf32>
    %226 = arith.addf %224, %225 : vector<8x128xf32>
    %227 = arith.index_cast %c5_i32 : i32 to index
    %c0_60 = arith.constant 0 : index
    %c0_61 = arith.constant 0 : index
    %228 = vector.load %arg7[%227, %c0_60, %c0_61] : memref<8x8x128xf32, #tpu.memory_space<vmem>>, vector<1x8x128xf32>
    %229 = vector.shape_cast %228 : vector<1x8x128xf32> to vector<8x128xf32>
    %230 = vector.shape_cast %226 : vector<8x128xf32> to vector<1x8x128xf32>
    tpu.vector_store %arg7[%227, %c0_60, %c0_61], %230 {strides = array<i32>} : memref<8x8x128xf32, #tpu.memory_space<vmem>>, vector<1x8x128xf32>,
    %c6_i32 = arith.constant 6 : i32
    %231 = arith.index_cast %c6_i32 : i32 to index
    %c0_62 = arith.constant 0 : index
    %c0_63 = arith.constant 0 : index
    %232 = vector.load %arg2[%231, %c0_62, %c0_63] : memref<8x8x384xbf16, #tpu.memory_space<vmem>>, vector<1x8x384xbf16>
    %233 = vector.shape_cast %232 : vector<1x8x384xbf16> to vector<8x384xbf16>
    %234 = arith.extf %233 : vector<8x384xbf16> to vector<8x384xf32>
    %235 = arith.truncf %226 : vector<8x128xf32> to vector<8x128xbf16>
    %cst_64 = arith.constant dense<0.000000e+00> : vector<8x256xf32>
    %236 = tpu.matmul %235, %3, %cst_64 {dimension_numbers = #tpu.dot_dimension_numbers<[1], [0], [0], [1], [0, 0, 1, 1], [], []>} : vector<8x128xbf16>, vector<128x256xbf16>, vector<8x256xf32> -> vector<8x256xf32>
    %cst_65 = arith.constant dense<0.000000e+00> : vector<8x128xf32>
    %237 = tpu.matmul %235, %4, %cst_65 {dimension_numbers = #tpu.dot_dimension_numbers<[1], [0], [0], [1], [0, 0, 1, 1], [], []>} : vector<8x128xbf16>, vector<128x128xbf16>, vector<8x128xf32> -> vector<8x128xf32>
    %238 = vector.extract_strided_slice %234 {offsets = [0, 0], sizes = [8, 128], strides = [1, 1]} : vector<8x384xf32> to vector<8x128xf32>
    %239 = vector.extract_strided_slice %236 {offsets = [0, 0], sizes = [8, 128], strides = [1, 1]} : vector<8x256xf32> to vector<8x128xf32>
    %240 = arith.addf %238, %239 : vector<8x128xf32>
    %241 = arith.negf %240 : vector<8x128xf32>
    %242 = math.exp %241 : vector<8x128xf32>
    %cst_66 = arith.constant 1.000000e+00 : f32
    %243 = vector.broadcast %cst_66 : f32 to vector<8x128xf32>
    %244 = arith.addf %243, %242 : vector<8x128xf32>
    %245 = arith.divf %243, %244 : vector<8x128xf32>
    %246 = vector.extract_strided_slice %234 {offsets = [0, 128], sizes = [8, 128], strides = [1, 1]} : vector<8x384xf32> to vector<8x128xf32>
    %247 = vector.extract_strided_slice %236 {offsets = [0, 128], sizes = [8, 128], strides = [1, 1]} : vector<8x256xf32> to vector<8x128xf32>
    %248 = arith.addf %246, %247 : vector<8x128xf32>
    %249 = arith.negf %248 : vector<8x128xf32>
    %250 = math.exp %249 : vector<8x128xf32>
    %cst_67 = arith.constant 1.000000e+00 : f32
    %251 = vector.broadcast %cst_67 : f32 to vector<8x128xf32>
    %252 = arith.addf %251, %250 : vector<8x128xf32>
    %253 = arith.divf %251, %252 : vector<8x128xf32>
    %254 = vector.extract_strided_slice %234 {offsets = [0, 256], sizes = [8, 128], strides = [1, 1]} : vector<8x384xf32> to vector<8x128xf32>
    %255 = arith.addf %237, %7 : vector<8x128xf32>
    %256 = arith.mulf %245, %255 : vector<8x128xf32>
    %257 = arith.addf %254, %256 : vector<8x128xf32>
    %258 = math.tanh %257 : vector<8x128xf32>
    %cst_68 = arith.constant 1.000000e+00 : f32
    %259 = vector.broadcast %cst_68 : f32 to vector<8x128xf32>
    %260 = arith.subf %259, %253 : vector<8x128xf32>
    %261 = arith.mulf %260, %258 : vector<8x128xf32>
    %262 = arith.mulf %253, %226 : vector<8x128xf32>
    %263 = arith.addf %261, %262 : vector<8x128xf32>
    %264 = arith.index_cast %c6_i32 : i32 to index
    %c0_69 = arith.constant 0 : index
    %c0_70 = arith.constant 0 : index
    %265 = vector.load %arg7[%264, %c0_69, %c0_70] : memref<8x8x128xf32, #tpu.memory_space<vmem>>, vector<1x8x128xf32>
    %266 = vector.shape_cast %265 : vector<1x8x128xf32> to vector<8x128xf32>
    %267 = vector.shape_cast %263 : vector<8x128xf32> to vector<1x8x128xf32>
    tpu.vector_store %arg7[%264, %c0_69, %c0_70], %267 {strides = array<i32>} : memref<8x8x128xf32, #tpu.memory_space<vmem>>, vector<1x8x128xf32>,
    %c7_i32 = arith.constant 7 : i32
    %268 = arith.index_cast %c7_i32 : i32 to index
    %c0_71 = arith.constant 0 : index
    %c0_72 = arith.constant 0 : index
    %269 = vector.load %arg2[%268, %c0_71, %c0_72] : memref<8x8x384xbf16, #tpu.memory_space<vmem>>, vector<1x8x384xbf16>
    %270 = vector.shape_cast %269 : vector<1x8x384xbf16> to vector<8x384xbf16>
    %271 = arith.extf %270 : vector<8x384xbf16> to vector<8x384xf32>
    %272 = arith.truncf %263 : vector<8x128xf32> to vector<8x128xbf16>
    %cst_73 = arith.constant dense<0.000000e+00> : vector<8x256xf32>
    %273 = tpu.matmul %272, %3, %cst_73 {dimension_numbers = #tpu.dot_dimension_numbers<[1], [0], [0], [1], [0, 0, 1, 1], [], []>} : vector<8x128xbf16>, vector<128x256xbf16>, vector<8x256xf32> -> vector<8x256xf32>
    %cst_74 = arith.constant dense<0.000000e+00> : vector<8x128xf32>
    %274 = tpu.matmul %272, %4, %cst_74 {dimension_numbers = #tpu.dot_dimension_numbers<[1], [0], [0], [1], [0, 0, 1, 1], [], []>} : vector<8x128xbf16>, vector<128x128xbf16>, vector<8x128xf32> -> vector<8x128xf32>
    %275 = vector.extract_strided_slice %271 {offsets = [0, 0], sizes = [8, 128], strides = [1, 1]} : vector<8x384xf32> to vector<8x128xf32>
    %276 = vector.extract_strided_slice %273 {offsets = [0, 0], sizes = [8, 128], strides = [1, 1]} : vector<8x256xf32> to vector<8x128xf32>
    %277 = arith.addf %275, %276 : vector<8x128xf32>
    %278 = arith.negf %277 : vector<8x128xf32>
    %279 = math.exp %278 : vector<8x128xf32>
    %cst_75 = arith.constant 1.000000e+00 : f32
    %280 = vector.broadcast %cst_75 : f32 to vector<8x128xf32>
    %281 = arith.addf %280, %279 : vector<8x128xf32>
    %282 = arith.divf %280, %281 : vector<8x128xf32>
    %283 = vector.extract_strided_slice %271 {offsets = [0, 128], sizes = [8, 128], strides = [1, 1]} : vector<8x384xf32> to vector<8x128xf32>
    %284 = vector.extract_strided_slice %273 {offsets = [0, 128], sizes = [8, 128], strides = [1, 1]} : vector<8x256xf32> to vector<8x128xf32>
    %285 = arith.addf %283, %284 : vector<8x128xf32>
    %286 = arith.negf %285 : vector<8x128xf32>
    %287 = math.exp %286 : vector<8x128xf32>
    %cst_76 = arith.constant 1.000000e+00 : f32
    %288 = vector.broadcast %cst_76 : f32 to vector<8x128xf32>
    %289 = arith.addf %288, %287 : vector<8x128xf32>
    %290 = arith.divf %288, %289 : vector<8x128xf32>
    %291 = vector.extract_strided_slice %271 {offsets = [0, 256], sizes = [8, 128], strides = [1, 1]} : vector<8x384xf32> to vector<8x128xf32>
    %292 = arith.addf %274, %7 : vector<8x128xf32>
    %293 = arith.mulf %282, %292 : vector<8x128xf32>
    %294 = arith.addf %291, %293 : vector<8x128xf32>
    %295 = math.tanh %294 : vector<8x128xf32>
    %cst_77 = arith.constant 1.000000e+00 : f32
    %296 = vector.broadcast %cst_77 : f32 to vector<8x128xf32>
    %297 = arith.subf %296, %290 : vector<8x128xf32>
    %298 = arith.mulf %297, %295 : vector<8x128xf32>
    %299 = arith.mulf %290, %263 : vector<8x128xf32>
    %300 = arith.addf %298, %299 : vector<8x128xf32>
    %301 = arith.index_cast %c7_i32 : i32 to index
    %c0_78 = arith.constant 0 : index
    %c0_79 = arith.constant 0 : index
    %302 = vector.load %arg7[%301, %c0_78, %c0_79] : memref<8x8x128xf32, #tpu.memory_space<vmem>>, vector<1x8x128xf32>
    %303 = vector.shape_cast %302 : vector<1x8x128xf32> to vector<8x128xf32>
    %304 = vector.shape_cast %300 : vector<8x128xf32> to vector<1x8x128xf32>
    tpu.vector_store %arg7[%301, %c0_78, %c0_79], %304 {strides = array<i32>} : memref<8x8x128xf32, #tpu.memory_space<vmem>>, vector<1x8x128xf32>,
    %c8_i32 = arith.constant 8 : i32
    %c0_80 = arith.constant 0 : index
    %c0_81 = arith.constant 0 : index
    %305 = vector.load %arg9[%c0_80, %c0_81] : memref<8x128xf32, #tpu.memory_space<vmem>>, vector<8x128xf32>
    tpu.vector_store %arg9[%c0_80, %c0_81], %300 {strides = array<i32>} : memref<8x128xf32, #tpu.memory_space<vmem>>, vector<8x128xf32>,
    %c0_i32_82 = arith.constant 0 : i32
    %306 = arith.cmpi eq, %arg1, %c0_i32_82 : i32
    %307 = arith.extui %306 : i1 to i32
    %c0_i32_83 = arith.constant 0 : i32
    %308 = arith.cmpi ne, %307, %c0_i32_83 : i32
    scf.if %308 {
      %c0_84 = arith.constant 0 : index
      %c0_85 = arith.constant 0 : index
      %309 = vector.load %arg8[%c0_84, %c0_85] : memref<8x128xf32, #tpu.memory_space<vmem>>, vector<8x128xf32>
      tpu.vector_store %arg8[%c0_84, %c0_85], %300 {strides = array<i32>} : memref<8x128xf32, #tpu.memory_space<vmem>>, vector<8x128xf32>,
    } else {
    }
    return
  }
  func.func @transform_0(%arg0: i32, %arg1: i32) -> (i32, i32, i32) {
    %c0_i32 = arith.constant 0 : i32
    %c0_i32_0 = arith.constant 0 : i32
    return %arg1, %arg0, %c0_i32 : i32, i32, i32
  }
  func.func @transform_1(%arg0: i32, %arg1: i32) -> (i32, i32) {
    %c0_i32 = arith.constant 0 : i32
    %c0_i32_0 = arith.constant 0 : i32
    %c0_i32_1 = arith.constant 0 : i32
    return %c0_i32, %c0_i32_0 : i32, i32
  }
  func.func @transform_2(%arg0: i32, %arg1: i32) -> (i32, i32) {
    %c0_i32 = arith.constant 0 : i32
    %c0_i32_0 = arith.constant 0 : i32
    %c0_i32_1 = arith.constant 0 : i32
    return %c0_i32, %c0_i32_0 : i32, i32
  }
  func.func @transform_3(%arg0: i32, %arg1: i32) -> (i32, i32) {
    %c0_i32 = arith.constant 0 : i32
    %c0_i32_0 = arith.constant 0 : i32
    %c0_i32_1 = arith.constant 0 : i32
    return %c0_i32, %c0_i32_0 : i32, i32
  }
  func.func @transform_4(%arg0: i32, %arg1: i32) -> (i32, i32) {
    %c0_i32 = arith.constant 0 : i32
    %c0_i32_0 = arith.constant 0 : i32
    return %arg0, %c0_i32 : i32, i32
  }
  func.func @transform_5(%arg0: i32, %arg1: i32) -> (i32, i32, i32) {
    %c0_i32 = arith.constant 0 : i32
    %c0_i32_0 = arith.constant 0 : i32
    return %arg1, %arg0, %c0_i32 : i32, i32, i32
  }
  func.func @transform_6(%arg0: i32, %arg1: i32) -> (i32, i32) {
    %c0_i32 = arith.constant 0 : i32
    %c0_i32_0 = arith.constant 0 : i32
    return %arg0, %c0_i32 : i32, i32
  }
}

</mosaic_0001>

<llo_original>
// kernel: tpu_custom_call.1
$region0: #{tpu_custom_call.1}
  #allocation0 [shape = 'u32[]', space=smem, size = 0x4, offset = 0x4, fixed_abs, tag = 'smem constant byte address 0x4 - core index']
  #allocation1 [shape = 'u32[144,128]{1,0:T(1,128)}', space=vmem, size = 0x12000, scoped, tag = 'internal scratch']
  #allocation2 [shape = 'f32[8,128]{1,0:T(8,128)}', space=vmem, size = 0x1000, scoped, tag = 'scratch operand']
  %s0 = inlined_call_operand.hbm [shape: bf16[8,8,384], index: 0, kind: input, shape index: {}]
  %s1 = inlined_call_operand.hbm [shape: bf16[128,256], index: 1, kind: input, shape index: {}]
  %s2 = inlined_call_operand.hbm [shape: bf16[128,128], index: 2, kind: input, shape index: {}]
  %s3 = inlined_call_operand.vmem [shape: f32[1,128], index: 3, kind: input, shape index: {}]
  %s4 = inlined_call_operand.vmem [shape: f32[8,128], index: 4, kind: input, shape index: {}]
  %s5 = inlined_call_operand.hbm [shape: f32[8,8,128], index: 5, kind: output, shape index: {0}]
  %s6 = inlined_call_operand.hbm [shape: f32[8,128], index: 6, kind: output, shape index: {1}]
  %7 = xla_tuple %s5, %s6
  %s8 = sld [smem:[#allocation0]]
  $region58: #{tpu_custom_call.1} parent=0
    _
  %s10 = ssub.s32 1, %s8
  %s11 = scalar_select 0, %s10, %s8
  $region1: #{tpu_custom_call.1} parent=0
    #allocation3 [shape = 'u8[49152]{0}', space=vmem, size = 0xc000, scoped, tag = 'input window, operand 0, single buffered']
    #allocation4 [shape = 's32[1]{0}', space=sflag, size = 0x4, scoped, tag = 'scoped memory for tpu_custom_call.1']
    #allocation5 [shape = 's32[1]{0}', space=sflag, size = 0x4, scoped, tag = 'scoped memory for tpu_custom_call.1']
    #allocation6 [shape = 'u8[65536]{0}', space=vmem, size = 0x10000, scoped, tag = 'input window, operand 1, single buffered']
    #allocation7 [shape = 's32[1]{0}', space=sflag, size = 0x4, scoped, tag = 'scoped memory for tpu_custom_call.1']
    #allocation8 [shape = 'u8[32768]{0}', space=vmem, size = 0x8000, scoped, tag = 'input window, operand 2, single buffered']
    #allocation9 [shape = 'u8[32768]{0}', space=vmem, size = 0x8000, scoped, tag = 'output window, operand 0, single buffered']
    #allocation10 [shape = 'u8[4096]{0}', space=vmem, size = 0x1000, scoped, tag = 'output window, operand 1, single buffered']
    #allocation11 [shape = 's32[1]{0}', space=sflag, size = 0x4, scoped, tag = 'scoped memory for tpu_custom_call.1']
    %12 = vsyncpa [#allocation4], 0
    %13 = vsyncpa [#allocation7], 0
    %14 = vsyncpa [#allocation5], 0
    %15 = vsyncpa [#allocation11], 0
    // Predicated region
    $region2: #{tpu_custom_call.1} parent=1 // pred_check
      _
    $region3: #{tpu_custom_call.1} parent=1 // pred_check_branch
      %17 = sbr.rel (0) target = $region5
    $region4: #{tpu_custom_call.1} parent=1 // pred_region
      %s19 = ssub.s32 1536, 1536
      %20 = vsyncadd [#allocation4], %s19
      %s21 = sshll.u32 [#allocation3], 4
      %s22 = int_to_ptr.vmem [resolvable:$true] %s21
      %27 = dma.hbm_to_vmem [thread:$0]  %s0, 1536, %s22, [#allocation4], 192, 192, 12
    $region5: #{tpu_custom_call.1} parent=1 // pred_fallthru
      _
    // Predicated region
    $region6: #{tpu_custom_call.1} parent=1 // pred_check
      _
    $region7: #{tpu_custom_call.1} parent=1 // pred_check_branch
      %29 = sbr.rel (0) target = $region9
    $region8: #{tpu_custom_call.1} parent=1 // pred_region
      %s31 = ssub.s32 2048, 2048
      %32 = vsyncadd [#allocation7], %s31
      %s33 = sshll.u32 [#allocation6], 4
      %s34 = int_to_ptr.vmem [resolvable:$true] %s33
      %39 = dma.hbm_to_vmem [thread:$0]  %s1, 2048, %s34, [#allocation7], 128, 128, 8
    $region9: #{tpu_custom_call.1} parent=1 // pred_fallthru
      _
    // Predicated region
    $region10: #{tpu_custom_call.1} parent=1 // pred_check
      _
    $region11: #{tpu_custom_call.1} parent=1 // pred_check_branch
      %41 = sbr.rel (0) target = $region13
    $region12: #{tpu_custom_call.1} parent=1 // pred_region
      %s43 = ssub.s32 1024, 1024
      %44 = vsyncadd [#allocation7], %s43
      %s45 = sshll.u32 [#allocation8], 4
      %s46 = int_to_ptr.vmem [resolvable:$true] %s45
      %51 = dma.hbm_to_vmem [thread:$0]  %s2, 1024, %s46, [#allocation7], 64, 64, 4
    $region13: #{tpu_custom_call.1} parent=1 // pred_fallthru
      _
    // Predicated region
    $region14: #{tpu_custom_call.1} parent=1 // pred_check
      _
    $region15: #{tpu_custom_call.1} parent=1 // pred_check_branch
      %53 = sbr.rel (0) target = $region17
    $region16: #{tpu_custom_call.1} parent=1 // pred_region
      _
    $region17: #{tpu_custom_call.1} parent=1 // pred_fallthru
      _
    // Predicated region
    $region18: #{tpu_custom_call.1} parent=1 // pred_check
      _
    $region19: #{tpu_custom_call.1} parent=1 // pred_check_branch
      %55 = sbr.rel (0) target = $region21
    $region20: #{tpu_custom_call.1} parent=1 // pred_region
      _
    $region21: #{tpu_custom_call.1} parent=1 // pred_fallthru
      _
    // Predicated region
    $region22: #{tpu_custom_call.1} parent=1 // pred_check
      _
    $region23: #{tpu_custom_call.1} parent=1 // pred_check_branch
      %57 = sbr.rel (0) target = $region25
    $region24: #{tpu_custom_call.1} parent=1 // pred_region
      %58 = dma.done [#allocation4], 1536
    $region25: #{tpu_custom_call.1} parent=1 // pred_fallthru
      _
    // Predicated region
    $region26: #{tpu_custom_call.1} parent=1 // pred_check
      _
    $region27: #{tpu_custom_call.1} parent=1 // pred_check_branch
      %60 = sbr.rel (0) target = $region29
    $region28: #{tpu_custom_call.1} parent=1 // pred_region
      %61 = dma.done [#allocation7], 2048
    $region29: #{tpu_custom_call.1} parent=1 // pred_fallthru
      _
    // Predicated region
    $region30: #{tpu_custom_call.1} parent=1 // pred_check
      _
    $region31: #{tpu_custom_call.1} parent=1 // pred_check_branch
      %63 = sbr.rel (0) target = $region33
    $region32: #{tpu_custom_call.1} parent=1 // pred_region
      %64 = dma.done [#allocation7], 1024
    $region33: #{tpu_custom_call.1} parent=1 // pred_fallthru
      _
    %p66 = scmp.eq.s32.totalorder 0, 0
    // Predicated region
    $region34: #{tpu_custom_call.1} parent=1 // pred_check
      %p67 = pneg %p66
    $region35: #{tpu_custom_call.1} parent=1 // pred_check_branch
      %69 = sbr.rel (%p67) target = $region37
    $region36: #{tpu_custom_call.1} parent=1 // pred_region
      %v70 = vld [vmem:[%s4] sm:$0xff]
      %71 = vst [vmem:[#allocation2] sm:$0xff] %v70
    $region37: #{tpu_custom_call.1} parent=1 // pred_fallthru
      _
    %v72 = vld [vmem:[#allocation6] sm:$0xff]
    %v73 = vld [vmem:[#allocation6 + $0x8] sm:$0xff]
    %v74 = vld [vmem:[#allocation6 + $0x10] sm:$0xff]
    %v75 = vld [vmem:[#allocation6 + $0x18] sm:$0xff]
    %v76 = vld [vmem:[#allocation6 + $0x20] sm:$0xff]
    %v77 = vld [vmem:[#allocation6 + $0x28] sm:$0xff]
    %v78 = vld [vmem:[#allocation6 + $0x30] sm:$0xff]
    %v79 = vld [vmem:[#allocation6 + $0x38] sm:$0xff]
    %v80 = vld [vmem:[#allocation6 + $0x40] sm:$0xff]
    %v81 = vld [vmem:[#allocation6 + $0x48] sm:$0xff]
    %v82 = vld [vmem:[#allocation6 + $0x50] sm:$0xff]
    %v83 = vld [vmem:[#allocation6 + $0x58] sm:$0xff]
    %v84 = vld [vmem:[#allocation6 + $0x60] sm:$0xff]
    %v85 = vld [vmem:[#allocation6 + $0x68] sm:$0xff]
    %v86 = vld [vmem:[#allocation6 + $0x70] sm:$0xff]
    %v87 = vld [vmem:[#allocation6 + $0x78] sm:$0xff]
    %v88 = vld [vmem:[#allocation8] sm:$0xf]
    %v89 = vld [vmem:[#allocation8 + $0x4] sm:$0xf]
    %v90 = vld [vmem:[#allocation8 + $0x8] sm:$0xf]
    %v91 = vld [vmem:[#allocation8 + $0xc] sm:$0xf]
    %v92 = vld [vmem:[#allocation8 + $0x10] sm:$0xf]
    %v93 = vld [vmem:[#allocation8 + $0x14] sm:$0xf]
    %v94 = vld [vmem:[#allocation8 + $0x18] sm:$0xf]
    %v95 = vld [vmem:[#allocation8 + $0x1c] sm:$0xf]
    %v96 = vld [vmem:[#allocation8 + $0x20] sm:$0xf]
    %v97 = vld [vmem:[#allocation8 + $0x24] sm:$0xf]
    %v98 = vld [vmem:[#allocation8 + $0x28] sm:$0xf]
    %v99 = vld [vmem:[#allocation8 + $0x2c] sm:$0xf]
    %v100 = vld [vmem:[#allocation8 + $0x30] sm:$0xf]
    %v101 = vld [vmem:[#allocation8 + $0x34] sm:$0xf]
    %v102 = vld [vmem:[#allocation8 + $0x38] sm:$0xf]
    %v103 = vld [vmem:[#allocation8 + $0x3c] sm:$0xf]
    %v104 = vld [vmem:[%s3] sm:$0x1]
    %v106 = vlaneseq
    %v107 = vshrl.u32 %v106, 7
    %v108 = vsub.s32 0, %v107
    %v109 = vrot.slane %v104, %v108
    %v111 = vld [vmem:[#allocation2] sm:$0xff]
    %v112 = vld [vmem:[#allocation3] sm:$0xff]
    %v113 = vld [vmem:[#allocation3 + $0x8] sm:$0xf]
    %v114 = vunpack.c.l.bf16 %v112
    %v115 = vunpack.c.h.bf16 %v112
    %v116 = vunpack.c.l.bf16 %v113
    %v117 = vpack.c.bf16 %v111, %v111
    %v134 = vunpack.c.l.b16 %v72
    %v135 = vunpack.c.h.b16 %v72
    %v136 = vunpack.c.l.b16 %v73
    %v137 = vunpack.c.h.b16 %v73
    %v138 = vunpack.c.l.b16 %v74
    %v139 = vunpack.c.h.b16 %v74
    %v140 = vunpack.c.l.b16 %v75
    %v141 = vunpack.c.h.b16 %v75
    %v142 = vunpack.c.l.b16 %v76
    %v143 = vunpack.c.h.b16 %v76
    %v144 = vunpack.c.l.b16 %v77
    %v145 = vunpack.c.h.b16 %v77
    %v146 = vunpack.c.l.b16 %v78
    %v147 = vunpack.c.h.b16 %v78
    %v148 = vunpack.c.l.b16 %v79
    %v149 = vunpack.c.h.b16 %v79
    %v150 = vunpack.c.l.b16 %v80
    %v151 = vunpack.c.h.b16 %v80
    %v152 = vunpack.c.l.b16 %v81
    %v153 = vunpack.c.h.b16 %v81
    %v154 = vunpack.c.l.b16 %v82
    %v155 = vunpack.c.h.b16 %v82
    %v156 = vunpack.c.l.b16 %v83
    %v157 = vunpack.c.h.b16 %v83
    %v158 = vunpack.c.l.b16 %v84
    %v159 = vunpack.c.h.b16 %v84
    %v160 = vunpack.c.l.b16 %v85
    %v161 = vunpack.c.h.b16 %v85
    %v162 = vunpack.c.l.b16 %v86
    %v163 = vunpack.c.h.b16 %v86
    %v164 = vunpack.c.l.b16 %v87
    %v165 = vunpack.c.h.b16 %v87
    %v166 = vpack.c.b16 %v136, %v134
    %v167 = vpack.c.b16 %v137, %v135
    %v168 = vpack.c.b16 %v140, %v138
    %v169 = vpack.c.b16 %v141, %v139
    %v170 = vpack.c.b16 %v144, %v142
    %v171 = vpack.c.b16 %v145, %v143
    %v172 = vpack.c.b16 %v148, %v146
    %v173 = vpack.c.b16 %v149, %v147
    %v174 = vpack.c.b16 %v152, %v150
    %v175 = vpack.c.b16 %v153, %v151
    %v176 = vpack.c.b16 %v156, %v154
    %v177 = vpack.c.b16 %v157, %v155
    %v178 = vpack.c.b16 %v160, %v158
    %v179 = vpack.c.b16 %v161, %v159
    %v180 = vpack.c.b16 %v164, %v162
    %v181 = vpack.c.b16 %v165, %v163
    %198 = vmatprep.subr.bf16.mxu0 %v167
    %199 = vmatpush1.bf16.msra.mxu0 %v166
    %200 = vmatprep.subr.bf16.mxu0 %v169
    %201 = vmatpush1.bf16.msra.mxu0 %v168
    %202 = vmatprep.subr.bf16.mxu0 %v171
    %203 = vmatpush1.bf16.msra.mxu0 %v170
    %204 = vmatprep.subr.bf16.mxu0 %v173
    %205 = vmatpush1.bf16.msra.mxu0 %v172
    %206 = vmatprep.subr.bf16.mxu0 %v175
    %207 = vmatpush1.bf16.msra.mxu0 %v174
    %208 = vmatprep.subr.bf16.mxu0 %v177
    %209 = vmatpush1.bf16.msra.mxu0 %v176
    %210 = vmatprep.subr.bf16.mxu0 %v179
    %211 = vmatpush1.bf16.msra.mxu0 %v178
    %212 = vmatprep.subr.bf16.mxu0 %v181
    %213 = vmatpush1.bf16.msra.mxu0 %v180
    %214 = vmatprep.subr.bf16.mxu0 0
    %215 = vmatpush1.bf16.msra.mxu0 0
    %216 = vmatprep.subr.bf16.mxu0 0
    %217 = vmatpush1.bf16.msra.mxu0 0
    %218 = vmatprep.subr.bf16.mxu0 0
    %219 = vmatpush1.bf16.msra.mxu0 0
    %220 = vmatprep.subr.bf16.mxu0 0
    %221 = vmatpush1.bf16.msra.mxu0 0
    %222 = vmatprep.subr.bf16.mxu0 0
    %223 = vmatpush1.bf16.msra.mxu0 0
    %224 = vmatprep.subr.bf16.mxu0 0
    %225 = vmatpush1.bf16.msra.mxu0 0
    %226 = vmatprep.subr.bf16.mxu0 0
    %227 = vmatpush1.bf16.msra.mxu0 0
    %228 = vmatprep.subr.bf16.mxu0 0
    %229 = vmatpush1.bf16.msra.mxu0 0
    %230 = vmatprep.mubr.bf16.mxu0 0
    %231 = vmatmul.mubr.bf16.gmra.mrb[0].mxu0 %v117
    %v232 = vpop.f32.mrb[0].mxu0
    %v233 = vadd.f32 0.0, %v232
    %v234 = vpop.f32.mrb[0].mxu0
    %v235 = vadd.f32 0.0, %v234
    %v236 = vpop.f32.mrb[0].mxu0
    %v237 = vpop.f32.mrb[0].mxu0
    %238 = vdwg.mxu0
    %v239 = vadd.f32 %v114, %v233
    %v240 = vxor.u32 %v239, 2147483648
    %v241 = vmul.f32 %v240, 1.442695
    %v242 = vpow.pop %v241
    %v243 = vadd.f32 %v242, 1.0
    %v244 = vrcp.pop %v243
    %v245 = vmul.f32 1.0, %v244
    %v246 = vadd.f32 %v115, %v235
    %v247 = vxor.u32 %v246, 2147483648
    %v248 = vmul.f32 %v247, 1.442695
    %v249 = vpow.pop %v248
    %v250 = vadd.f32 %v249, 1.0
    %v251 = vrcp.pop %v250
    %v252 = vmul.f32 1.0, %v251
    %v269 = vunpack.c.l.b16 %v88
    %v270 = vunpack.c.l.b16 %v89
    %v271 = vunpack.c.l.b16 %v90
    %v272 = vunpack.c.l.b16 %v91
    %v273 = vunpack.c.l.b16 %v92
    %v274 = vunpack.c.l.b16 %v93
    %v275 = vunpack.c.l.b16 %v94
    %v276 = vunpack.c.l.b16 %v95
    %v277 = vunpack.c.l.b16 %v96
    %v278 = vunpack.c.l.b16 %v97
    %v279 = vunpack.c.l.b16 %v98
    %v280 = vunpack.c.l.b16 %v99
    %v281 = vunpack.c.l.b16 %v100
    %v282 = vunpack.c.l.b16 %v101
    %v283 = vunpack.c.l.b16 %v102
    %v284 = vunpack.c.l.b16 %v103
    %v285 = vpack.c.b16 %v270, %v269
    %v286 = vpack.c.b16 %v272, %v271
    %v287 = vpack.c.b16 %v274, %v273
    %v288 = vpack.c.b16 %v276, %v275
    %v289 = vpack.c.b16 %v278, %v277
    %v290 = vpack.c.b16 %v280, %v279
    %v291 = vpack.c.b16 %v282, %v281
    %v292 = vpack.c.b16 %v284, %v283
    %301 = vmatprep.subr.bf16.mxu0 0
    %302 = vmatpush1.bf16.msra.mxu0 %v285
    %303 = vmatprep.subr.bf16.mxu0 0
    %304 = vmatpush1.bf16.msra.mxu0 %v286
    %305 = vmatprep.subr.bf16.mxu0 0
    %306 = vmatpush1.bf16.msra.mxu0 %v287
    %307 = vmatprep.subr.bf16.mxu0 0
    %308 = vmatpush1.bf16.msra.mxu0 %v288
    %309 = vmatprep.subr.bf16.mxu0 0
    %310 = vmatpush1.bf16.msra.mxu0 %v289
    %311 = vmatprep.subr.bf16.mxu0 0
    %312 = vmatpush1.bf16.msra.mxu0 %v290
    %313 = vmatprep.subr.bf16.mxu0 0
    %314 = vmatpush1.bf16.msra.mxu0 %v291
    %315 = vmatprep.subr.bf16.mxu0 0
    %316 = vmatpush1.bf16.msra.mxu0 %v292
    %317 = vmatprep.subr.bf16.mxu0 0
    %318 = vmatpush1.bf16.msra.mxu0 0
    %319 = vmatprep.subr.bf16.mxu0 0
    %320 = vmatpush1.bf16.msra.mxu0 0
    %321 = vmatprep.subr.bf16.mxu0 0
    %322 = vmatpush1.bf16.msra.mxu0 0
    %323 = vmatprep.subr.bf16.mxu0 0
    %324 = vmatpush1.bf16.msra.mxu0 0
    %325 = vmatprep.subr.bf16.mxu0 0
    %326 = vmatpush1.bf16.msra.mxu0 0
    %327 = vmatprep.subr.bf16.mxu0 0
    %328 = vmatpush1.bf16.msra.mxu0 0
    %329 = vmatprep.subr.bf16.mxu0 0
    %330 = vmatpush1.bf16.msra.mxu0 0
    %331 = vmatprep.subr.bf16.mxu0 0
    %332 = vmatpush1.bf16.msra.mxu0 0
    %333 = vmatprep.mubr.bf16.mxu0 0
    %334 = vmatmul.mubr.bf16.gmra.mrb[0].mxu0 %v117
    %v335 = vpop.f32.mrb[0].mxu0
    %v336 = vadd.f32 %v109, %v335
    %v337 = vpop.f32.mrb[0].mxu0
    %v338 = vpop.f32.mrb[0].mxu0
    %v339 = vpop.f32.mrb[0].mxu0
    %340 = vdwg.mxu0
    %v341 = vmul.f32 %v245, %v336
    %v342 = vadd.f32 %v116, %v341
    %v343 = vtanh.pop %v342
    %v344 = vsub.f32 1.0, %v252
    %v345 = vmul.f32 %v344, %v343
    %v346 = vmul.f32 %v252, %v111
    %v347 = vadd.f32 %v345, %v346
    %348 = vst [vmem:[#allocation9] sm:$0xff] %v347
    %s349 = scalar_lea.vmem [#allocation3], 12
    %v350 = vld [vmem:[%s349] sm:$0xff]
    %v351 = vld [vmem:[%s349 + $0x8] sm:$0xf]
    %v352 = vunpack.c.l.bf16 %v350
    %v353 = vunpack.c.h.bf16 %v350
    %v354 = vunpack.c.l.bf16 %v351
    %v355 = vpack.c.bf16 %v347, %v347
    %356 = vmatprep.subr.bf16.mxu0 %v167
    %357 = vmatpush1.bf16.msra.mxu0 %v166
    %358 = vmatprep.subr.bf16.mxu0 %v169
    %359 = vmatpush1.bf16.msra.mxu0 %v168
    %360 = vmatprep.subr.bf16.mxu0 %v171
    %361 = vmatpush1.bf16.msra.mxu0 %v170
    %362 = vmatprep.subr.bf16.mxu0 %v173
    %363 = vmatpush1.bf16.msra.mxu0 %v172
    %364 = vmatprep.subr.bf16.mxu0 %v175
    %365 = vmatpush1.bf16.msra.mxu0 %v174
    %366 = vmatprep.subr.bf16.mxu0 %v177
    %367 = vmatpush1.bf16.msra.mxu0 %v176
    %368 = vmatprep.subr.bf16.mxu0 %v179
    %369 = vmatpush1.bf16.msra.mxu0 %v178
    %370 = vmatprep.subr.bf16.mxu0 %v181
    %371 = vmatpush1.bf16.msra.mxu0 %v180
    %372 = vmatprep.subr.bf16.mxu0 0
    %373 = vmatpush1.bf16.msra.mxu0 0
    %374 = vmatprep.subr.bf16.mxu0 0
    %375 = vmatpush1.bf16.msra.mxu0 0
    %376 = vmatprep.subr.bf16.mxu0 0
    %377 = vmatpush1.bf16.msra.mxu0 0
    %378 = vmatprep.subr.bf16.mxu0 0
    %379 = vmatpush1.bf16.msra.mxu0 0
    %380 = vmatprep.subr.bf16.mxu0 0
    %381 = vmatpush1.bf16.msra.mxu0 0
    %382 = vmatprep.subr.bf16.mxu0 0
    %383 = vmatpush1.bf16.msra.mxu0 0
    %384 = vmatprep.subr.bf16.mxu0 0
    %385 = vmatpush1.bf16.msra.mxu0 0
    %386 = vmatprep.subr.bf16.mxu0 0
    %387 = vmatpush1.bf16.msra.mxu0 0
    %388 = vmatprep.mubr.bf16.mxu0 0
    %389 = vmatmul.mubr.bf16.gmra.mrb[0].mxu0 %v355
    %v390 = vpop.f32.mrb[0].mxu0
    %v391 = vadd.f32 0.0, %v390
    %v392 = vpop.f32.mrb[0].mxu0
    %v393 = vadd.f32 0.0, %v392
    %v394 = vpop.f32.mrb[0].mxu0
    %v395 = vpop.f32.mrb[0].mxu0
    %396 = vdwg.mxu0
    %v397 = vadd.f32 %v352, %v391
    %v398 = vxor.u32 %v397, 2147483648
    %v399 = vmul.f32 %v398, 1.442695
    %v400 = vpow.pop %v399
    %v401 = vadd.f32 %v400, 1.0
    %v402 = vrcp.pop %v401
    %v403 = vmul.f32 1.0, %v402
    %v404 = vadd.f32 %v353, %v393
    %v405 = vxor.u32 %v404, 2147483648
    %v406 = vmul.f32 %v405, 1.442695
    %v407 = vpow.pop %v406
    %v408 = vadd.f32 %v407, 1.0
    %v409 = vrcp.pop %v408
    %v410 = vmul.f32 1.0, %v409
    %411 = vmatprep.subr.bf16.mxu0 0
    %412 = vmatpush1.bf16.msra.mxu0 %v285
    %413 = vmatprep.subr.bf16.mxu0 0
    %414 = vmatpush1.bf16.msra.mxu0 %v286
    %415 = vmatprep.subr.bf16.mxu0 0
    %416 = vmatpush1.bf16.msra.mxu0 %v287
    %417 = vmatprep.subr.bf16.mxu0 0
    %418 = vmatpush1.bf16.msra.mxu0 %v288
    %419 = vmatprep.subr.bf16.mxu0 0
    %420 = vmatpush1.bf16.msra.mxu0 %v289
    %421 = vmatprep.subr.bf16.mxu0 0
    %422 = vmatpush1.bf16.msra.mxu0 %v290
    %423 = vmatprep.subr.bf16.mxu0 0
    %424 = vmatpush1.bf16.msra.mxu0 %v291
    %425 = vmatprep.subr.bf16.mxu0 0
    %426 = vmatpush1.bf16.msra.mxu0 %v292
    %427 = vmatprep.subr.bf16.mxu0 0
    %428 = vmatpush1.bf16.msra.mxu0 0
    %429 = vmatprep.subr.bf16.mxu0 0
    %430 = vmatpush1.bf16.msra.mxu0 0
    %431 = vmatprep.subr.bf16.mxu0 0
    %432 = vmatpush1.bf16.msra.mxu0 0
    %433 = vmatprep.subr.bf16.mxu0 0
    %434 = vmatpush1.bf16.msra.mxu0 0
    %435 = vmatprep.subr.bf16.mxu0 0
    %436 = vmatpush1.bf16.msra.mxu0 0
    %437 = vmatprep.subr.bf16.mxu0 0
    %438 = vmatpush1.bf16.msra.mxu0 0
    %439 = vmatprep.subr.bf16.mxu0 0
    %440 = vmatpush1.bf16.msra.mxu0 0
    %441 = vmatprep.subr.bf16.mxu0 0
    %442 = vmatpush1.bf16.msra.mxu0 0
    %443 = vmatprep.mubr.bf16.mxu0 0
    %444 = vmatmul.mubr.bf16.gmra.mrb[0].mxu0 %v355
    %v445 = vpop.f32.mrb[0].mxu0
    %v446 = vadd.f32 %v109, %v445
    %v447 = vpop.f32.mrb[0].mxu0
    %v448 = vpop.f32.mrb[0].mxu0
    %v449 = vpop.f32.mrb[0].mxu0
    %450 = vdwg.mxu0
    %v451 = vmul.f32 %v403, %v446
    %v452 = vadd.f32 %v354, %v451
    %v453 = vtanh.pop %v452
    %v454 = vsub.f32 1.0, %v410
    %v455 = vmul.f32 %v454, %v453
    %v456 = vmul.f32 %v410, %v347
    %v457 = vadd.f32 %v455, %v456
    %s458 = scalar_lea.vmem [#allocation9], 8
    %459 = vst [vmem:[%s458] sm:$0xff] %v457
    %s460 = scalar_lea.vmem [#allocation3], 24
    %v461 = vld [vmem:[%s460] sm:$0xff]
    %v462 = vld [vmem:[%s460 + $0x8] sm:$0xf]
    %v463 = vunpack.c.l.bf16 %v461
    %v464 = vunpack.c.h.bf16 %v461
    %v465 = vunpack.c.l.bf16 %v462
    %v466 = vpack.c.bf16 %v457, %v457
    %467 = vmatprep.subr.bf16.mxu0 %v167
    %468 = vmatpush1.bf16.msra.mxu0 %v166
    %469 = vmatprep.subr.bf16.mxu0 %v169
    %470 = vmatpush1.bf16.msra.mxu0 %v168
    %471 = vmatprep.subr.bf16.mxu0 %v171
    %472 = vmatpush1.bf16.msra.mxu0 %v170
    %473 = vmatprep.subr.bf16.mxu0 %v173
    %474 = vmatpush1.bf16.msra.mxu0 %v172
    %475 = vmatprep.subr.bf16.mxu0 %v175
    %476 = vmatpush1.bf16.msra.mxu0 %v174
    %477 = vmatprep.subr.bf16.mxu0 %v177
    %478 = vmatpush1.bf16.msra.mxu0 %v176
    %479 = vmatprep.subr.bf16.mxu0 %v179
    %480 = vmatpush1.bf16.msra.mxu0 %v178
    %481 = vmatprep.subr.bf16.mxu0 %v181
    %482 = vmatpush1.bf16.msra.mxu0 %v180
    %483 = vmatprep.subr.bf16.mxu0 0
    %484 = vmatpush1.bf16.msra.mxu0 0
    %485 = vmatprep.subr.bf16.mxu0 0
    %486 = vmatpush1.bf16.msra.mxu0 0
    %487 = vmatprep.subr.bf16.mxu0 0
    %488 = vmatpush1.bf16.msra.mxu0 0
    %489 = vmatprep.subr.bf16.mxu0 0
    %490 = vmatpush1.bf16.msra.mxu0 0
    %491 = vmatprep.subr.bf16.mxu0 0
    %492 = vmatpush1.bf16.msra.mxu0 0
    %493 = vmatprep.subr.bf16.mxu0 0
    %494 = vmatpush1.bf16.msra.mxu0 0
    %495 = vmatprep.subr.bf16.mxu0 0
    %496 = vmatpush1.bf16.msra.mxu0 0
    %497 = vmatprep.subr.bf16.mxu0 0
    %498 = vmatpush1.bf16.msra.mxu0 0
    %499 = vmatprep.mubr.bf16.mxu0 0
    %500 = vmatmul.mubr.bf16.gmra.mrb[0].mxu0 %v466
    %v501 = vpop.f32.mrb[0].mxu0
    %v502 = vadd.f32 0.0, %v501
    %v503 = vpop.f32.mrb[0].mxu0
    %v504 = vadd.f32 0.0, %v503
    %v505 = vpop.f32.mrb[0].mxu0
    %v506 = vpop.f32.mrb[0].mxu0
    %507 = vdwg.mxu0
    %v508 = vadd.f32 %v463, %v502
    %v509 = vxor.u32 %v508, 2147483648
    %v510 = vmul.f32 %v509, 1.442695
    %v511 = vpow.pop %v510
    %v512 = vadd.f32 %v511, 1.0
    %v513 = vrcp.pop %v512
    %v514 = vmul.f32 1.0, %v513
    %v515 = vadd.f32 %v464, %v504
    %v516 = vxor.u32 %v515, 2147483648
    %v517 = vmul.f32 %v516, 1.442695
    %v518 = vpow.pop %v517
    %v519 = vadd.f32 %v518, 1.0
    %v520 = vrcp.pop %v519
    %v521 = vmul.f32 1.0, %v520
    %522 = vmatprep.subr.bf16.mxu0 0
    %523 = vmatpush1.bf16.msra.mxu0 %v285
    %524 = vmatprep.subr.bf16.mxu0 0
    %525 = vmatpush1.bf16.msra.mxu0 %v286
    %526 = vmatprep.subr.bf16.mxu0 0
    %527 = vmatpush1.bf16.msra.mxu0 %v287
    %528 = vmatprep.subr.bf16.mxu0 0
    %529 = vmatpush1.bf16.msra.mxu0 %v288
    %530 = vmatprep.subr.bf16.mxu0 0
    %531 = vmatpush1.bf16.msra.mxu0 %v289
    %532 = vmatprep.subr.bf16.mxu0 0
    %533 = vmatpush1.bf16.msra.mxu0 %v290
    %534 = vmatprep.subr.bf16.mxu0 0
    %535 = vmatpush1.bf16.msra.mxu0 %v291
    %536 = vmatprep.subr.bf16.mxu0 0
    %537 = vmatpush1.bf16.msra.mxu0 %v292
    %538 = vmatprep.subr.bf16.mxu0 0
    %539 = vmatpush1.bf16.msra.mxu0 0
    %540 = vmatprep.subr.bf16.mxu0 0
    %541 = vmatpush1.bf16.msra.mxu0 0
    %542 = vmatprep.subr.bf16.mxu0 0
    %543 = vmatpush1.bf16.msra.mxu0 0
    %544 = vmatprep.subr.bf16.mxu0 0
    %545 = vmatpush1.bf16.msra.mxu0 0
    %546 = vmatprep.subr.bf16.mxu0 0
    %547 = vmatpush1.bf16.msra.mxu0 0
    %548 = vmatprep.subr.bf16.mxu0 0
    %549 = vmatpush1.bf16.msra.mxu0 0
    %550 = vmatprep.subr.bf16.mxu0 0
    %551 = vmatpush1.bf16.msra.mxu0 0
    %552 = vmatprep.subr.bf16.mxu0 0
    %553 = vmatpush1.bf16.msra.mxu0 0
    %554 = vmatprep.mubr.bf16.mxu0 0
    %555 = vmatmul.mubr.bf16.gmra.mrb[0].mxu0 %v466
    %v556 = vpop.f32.mrb[0].mxu0
    %v557 = vadd.f32 %v109, %v556
    %v558 = vpop.f32.mrb[0].mxu0
    %v559 = vpop.f32.mrb[0].mxu0
    %v560 = vpop.f32.mrb[0].mxu0
    %561 = vdwg.mxu0
    %v562 = vmul.f32 %v514, %v557
    %v563 = vadd.f32 %v465, %v562
    %v564 = vtanh.pop %v563
    %v565 = vsub.f32 1.0, %v521
    %v566 = vmul.f32 %v565, %v564
    %v567 = vmul.f32 %v521, %v457
    %v568 = vadd.f32 %v566, %v567
    %s569 = scalar_lea.vmem [#allocation9], 16
    %570 = vst [vmem:[%s569] sm:$0xff] %v568
    %s571 = scalar_lea.vmem [#allocation3], 36
    %v572 = vld [vmem:[%s571] sm:$0xff]
    %v573 = vld [vmem:[%s571 + $0x8] sm:$0xf]
    %v574 = vunpack.c.l.bf16 %v572
    %v575 = vunpack.c.h.bf16 %v572
    %v576 = vunpack.c.l.bf16 %v573
    %v577 = vpack.c.bf16 %v568, %v568
    %578 = vmatprep.subr.bf16.mxu0 %v167
    %579 = vmatpush1.bf16.msra.mxu0 %v166
    %580 = vmatprep.subr.bf16.mxu0 %v169
    %581 = vmatpush1.bf16.msra.mxu0 %v168
    %582 = vmatprep.subr.bf16.mxu0 %v171
    %583 = vmatpush1.bf16.msra.mxu0 %v170
    %584 = vmatprep.subr.bf16.mxu0 %v173
    %585 = vmatpush1.bf16.msra.mxu0 %v172
    %586 = vmatprep.subr.bf16.mxu0 %v175
    %587 = vmatpush1.bf16.msra.mxu0 %v174
    %588 = vmatprep.subr.bf16.mxu0 %v177
    %589 = vmatpush1.bf16.msra.mxu0 %v176
    %590 = vmatprep.subr.bf16.mxu0 %v179
    %591 = vmatpush1.bf16.msra.mxu0 %v178
    %592 = vmatprep.subr.bf16.mxu0 %v181
    %593 = vmatpush1.bf16.msra.mxu0 %v180
    %594 = vmatprep.subr.bf16.mxu0 0
    %595 = vmatpush1.bf16.msra.mxu0 0
    %596 = vmatprep.subr.bf16.mxu0 0
    %597 = vmatpush1.bf16.msra.mxu0 0
    %598 = vmatprep.subr.bf16.mxu0 0
    %599 = vmatpush1.bf16.msra.mxu0 0
    %600 = vmatprep.subr.bf16.mxu0 0
    %601 = vmatpush1.bf16.msra.mxu0 0
    %602 = vmatprep.subr.bf16.mxu0 0
    %603 = vmatpush1.bf16.msra.mxu0 0
    %604 = vmatprep.subr.bf16.mxu0 0
    %605 = vmatpush1.bf16.msra.mxu0 0
    %606 = vmatprep.subr.bf16.mxu0 0
    %607 = vmatpush1.bf16.msra.mxu0 0
    %608 = vmatprep.subr.bf16.mxu0 0
    %609 = vmatpush1.bf16.msra.mxu0 0
    %610 = vmatprep.mubr.bf16.mxu0 0
    %611 = vmatmul.mubr.bf16.gmra.mrb[0].mxu0 %v577
    %v612 = vpop.f32.mrb[0].mxu0
    %v613 = vadd.f32 0.0, %v612
    %v614 = vpop.f32.mrb[0].mxu0
    %v615 = vadd.f32 0.0, %v614
    %v616 = vpop.f32.mrb[0].mxu0
    %v617 = vpop.f32.mrb[0].mxu0
    %618 = vdwg.mxu0
    %v619 = vadd.f32 %v574, %v613
    %v620 = vxor.u32 %v619, 2147483648
    %v621 = vmul.f32 %v620, 1.442695
    %v622 = vpow.pop %v621
    %v623 = vadd.f32 %v622, 1.0
    %v624 = vrcp.pop %v623
    %v625 = vmul.f32 1.0, %v624
    %v626 = vadd.f32 %v575, %v615
    %v627 = vxor.u32 %v626, 2147483648
    %v628 = vmul.f32 %v627, 1.442695
    %v629 = vpow.pop %v628
    %v630 = vadd.f32 %v629, 1.0
    %v631 = vrcp.pop %v630
    %v632 = vmul.f32 1.0, %v631
    %633 = vmatprep.subr.bf16.mxu0 0
    %634 = vmatpush1.bf16.msra.mxu0 %v285
    %635 = vmatprep.subr.bf16.mxu0 0
    %636 = vmatpush1.bf16.msra.mxu0 %v286
    %637 = vmatprep.subr.bf16.mxu0 0
    %638 = vmatpush1.bf16.msra.mxu0 %v287
    %639 = vmatprep.subr.bf16.mxu0 0
    %640 = vmatpush1.bf16.msra.mxu0 %v288
    %641 = vmatprep.subr.bf16.mxu0 0
    %642 = vmatpush1.bf16.msra.mxu0 %v289
    %643 = vmatprep.subr.bf16.mxu0 0
    %644 = vmatpush1.bf16.msra.mxu0 %v290
    %645 = vmatprep.subr.bf16.mxu0 0
    %646 = vmatpush1.bf16.msra.mxu0 %v291
    %647 = vmatprep.subr.bf16.mxu0 0
    %648 = vmatpush1.bf16.msra.mxu0 %v292
    %649 = vmatprep.subr.bf16.mxu0 0
    %650 = vmatpush1.bf16.msra.mxu0 0
    %651 = vmatprep.subr.bf16.mxu0 0
    %652 = vmatpush1.bf16.msra.mxu0 0
    %653 = vmatprep.subr.bf16.mxu0 0
    %654 = vmatpush1.bf16.msra.mxu0 0
    %655 = vmatprep.subr.bf16.mxu0 0
    %656 = vmatpush1.bf16.msra.mxu0 0
    %657 = vmatprep.subr.bf16.mxu0 0
    %658 = vmatpush1.bf16.msra.mxu0 0
    %659 = vmatprep.subr.bf16.mxu0 0
    %660 = vmatpush1.bf16.msra.mxu0 0
    %661 = vmatprep.subr.bf16.mxu0 0
    %662 = vmatpush1.bf16.msra.mxu0 0
    %663 = vmatprep.subr.bf16.mxu0 0
    %664 = vmatpush1.bf16.msra.mxu0 0
    %665 = vmatprep.mubr.bf16.mxu0 0
    %666 = vmatmul.mubr.bf16.gmra.mrb[0].mxu0 %v577
    %v667 = vpop.f32.mrb[0].mxu0
    %v668 = vadd.f32 %v109, %v667
    %v669 = vpop.f32.mrb[0].mxu0
    %v670 = vpop.f32.mrb[0].mxu0
    %v671 = vpop.f32.mrb[0].mxu0
    %672 = vdwg.mxu0
    %v673 = vmul.f32 %v625, %v668
    %v674 = vadd.f32 %v576, %v673
    %v675 = vtanh.pop %v674
    %v676 = vsub.f32 1.0, %v632
    %v677 = vmul.f32 %v676, %v675
    %v678 = vmul.f32 %v632, %v568
    %v679 = vadd.f32 %v677, %v678
    %s680 = scalar_lea.vmem [#allocation9], 24
    %681 = vst [vmem:[%s680] sm:$0xff] %v679
    %s682 = scalar_lea.vmem [#allocation3], 48
    %v683 = vld [vmem:[%s682] sm:$0xff]
    %v684 = vld [vmem:[%s682 + $0x8] sm:$0xf]
    %v685 = vunpack.c.l.bf16 %v683
    %v686 = vunpack.c.h.bf16 %v683
    %v687 = vunpack.c.l.bf16 %v684
    %v688 = vpack.c.bf16 %v679, %v679
    %689 = vmatprep.subr.bf16.mxu0 %v167
    %690 = vmatpush1.bf16.msra.mxu0 %v166
    %691 = vmatprep.subr.bf16.mxu0 %v169
    %692 = vmatpush1.bf16.msra.mxu0 %v168
    %693 = vmatprep.subr.bf16.mxu0 %v171
    %694 = vmatpush1.bf16.msra.mxu0 %v170
    %695 = vmatprep.subr.bf16.mxu0 %v173
    %696 = vmatpush1.bf16.msra.mxu0 %v172
    %697 = vmatprep.subr.bf16.mxu0 %v175
    %698 = vmatpush1.bf16.msra.mxu0 %v174
    %699 = vmatprep.subr.bf16.mxu0 %v177
    %700 = vmatpush1.bf16.msra.mxu0 %v176
    %701 = vmatprep.subr.bf16.mxu0 %v179
    %702 = vmatpush1.bf16.msra.mxu0 %v178
    %703 = vmatprep.subr.bf16.mxu0 %v181
    %704 = vmatpush1.bf16.msra.mxu0 %v180
    %705 = vmatprep.subr.bf16.mxu0 0
    %706 = vmatpush1.bf16.msra.mxu0 0
    %707 = vmatprep.subr.bf16.mxu0 0
    %708 = vmatpush1.bf16.msra.mxu0 0
    %709 = vmatprep.subr.bf16.mxu0 0
    %710 = vmatpush1.bf16.msra.mxu0 0
    %711 = vmatprep.subr.bf16.mxu0 0
    %712 = vmatpush1.bf16.msra.mxu0 0
    %713 = vmatprep.subr.bf16.mxu0 0
    %714 = vmatpush1.bf16.msra.mxu0 0
    %715 = vmatprep.subr.bf16.mxu0 0
    %716 = vmatpush1.bf16.msra.mxu0 0
    %717 = vmatprep.subr.bf16.mxu0 0
    %718 = vmatpush1.bf16.msra.mxu0 0
    %719 = vmatprep.subr.bf16.mxu0 0
    %720 = vmatpush1.bf16.msra.mxu0 0
    %721 = vmatprep.mubr.bf16.mxu0 0
    %722 = vmatmul.mubr.bf16.gmra.mrb[0].mxu0 %v688
    %v723 = vpop.f32.mrb[0].mxu0
    %v724 = vadd.f32 0.0, %v723
    %v725 = vpop.f32.mrb[0].mxu0
    %v726 = vadd.f32 0.0, %v725
    %v727 = vpop.f32.mrb[0].mxu0
    %v728 = vpop.f32.mrb[0].mxu0
    %729 = vdwg.mxu0
    %v730 = vadd.f32 %v685, %v724
    %v731 = vxor.u32 %v730, 2147483648
    %v732 = vmul.f32 %v731, 1.442695
    %v733 = vpow.pop %v732
    %v734 = vadd.f32 %v733, 1.0
    %v735 = vrcp.pop %v734
    %v736 = vmul.f32 1.0, %v735
    %v737 = vadd.f32 %v686, %v726
    %v738 = vxor.u32 %v737, 2147483648
    %v739 = vmul.f32 %v738, 1.442695
    %v740 = vpow.pop %v739
    %v741 = vadd.f32 %v740, 1.0
    %v742 = vrcp.pop %v741
    %v743 = vmul.f32 1.0, %v742
    %744 = vmatprep.subr.bf16.mxu0 0
    %745 = vmatpush1.bf16.msra.mxu0 %v285
    %746 = vmatprep.subr.bf16.mxu0 0
    %747 = vmatpush1.bf16.msra.mxu0 %v286
    %748 = vmatprep.subr.bf16.mxu0 0
    %749 = vmatpush1.bf16.msra.mxu0 %v287
    %750 = vmatprep.subr.bf16.mxu0 0
    %751 = vmatpush1.bf16.msra.mxu0 %v288
    %752 = vmatprep.subr.bf16.mxu0 0
    %753 = vmatpush1.bf16.msra.mxu0 %v289
    %754 = vmatprep.subr.bf16.mxu0 0
    %755 = vmatpush1.bf16.msra.mxu0 %v290
    %756 = vmatprep.subr.bf16.mxu0 0
    %757 = vmatpush1.bf16.msra.mxu0 %v291
    %758 = vmatprep.subr.bf16.mxu0 0
    %759 = vmatpush1.bf16.msra.mxu0 %v292
    %760 = vmatprep.subr.bf16.mxu0 0
    %761 = vmatpush1.bf16.msra.mxu0 0
    %762 = vmatprep.subr.bf16.mxu0 0
    %763 = vmatpush1.bf16.msra.mxu0 0
    %764 = vmatprep.subr.bf16.mxu0 0
    %765 = vmatpush1.bf16.msra.mxu0 0
    %766 = vmatprep.subr.bf16.mxu0 0
    %767 = vmatpush1.bf16.msra.mxu0 0
    %768 = vmatprep.subr.bf16.mxu0 0
    %769 = vmatpush1.bf16.msra.mxu0 0
    %770 = vmatprep.subr.bf16.mxu0 0
    %771 = vmatpush1.bf16.msra.mxu0 0
    %772 = vmatprep.subr.bf16.mxu0 0
    %773 = vmatpush1.bf16.msra.mxu0 0
    %774 = vmatprep.subr.bf16.mxu0 0
    %775 = vmatpush1.bf16.msra.mxu0 0
    %776 = vmatprep.mubr.bf16.mxu0 0
    %777 = vmatmul.mubr.bf16.gmra.mrb[0].mxu0 %v688
    %v778 = vpop.f32.mrb[0].mxu0
    %v779 = vadd.f32 %v109, %v778
    %v780 = vpop.f32.mrb[0].mxu0
    %v781 = vpop.f32.mrb[0].mxu0
    %v782 = vpop.f32.mrb[0].mxu0
    %783 = vdwg.mxu0
    %v784 = vmul.f32 %v736, %v779
    %v785 = vadd.f32 %v687, %v784
    %v786 = vtanh.pop %v785
    %v787 = vsub.f32 1.0, %v743
    %v788 = vmul.f32 %v787, %v786
    %v789 = vmul.f32 %v743, %v679
    %v790 = vadd.f32 %v788, %v789
    %s791 = scalar_lea.vmem [#allocation9], 32
    %792 = vst [vmem:[%s791] sm:$0xff] %v790
    %s793 = scalar_lea.vmem [#allocation3], 60
    %v794 = vld [vmem:[%s793] sm:$0xff]
    %v795 = vld [vmem:[%s793 + $0x8] sm:$0xf]
    %v796 = vunpack.c.l.bf16 %v794
    %v797 = vunpack.c.h.bf16 %v794
    %v798 = vunpack.c.l.bf16 %v795
    %v799 = vpack.c.bf16 %v790, %v790
    %800 = vmatprep.subr.bf16.mxu0 %v167
    %801 = vmatpush1.bf16.msra.mxu0 %v166
    %802 = vmatprep.subr.bf16.mxu0 %v169
    %803 = vmatpush1.bf16.msra.mxu0 %v168
    %804 = vmatprep.subr.bf16.mxu0 %v171
    %805 = vmatpush1.bf16.msra.mxu0 %v170
    %806 = vmatprep.subr.bf16.mxu0 %v173
    %807 = vmatpush1.bf16.msra.mxu0 %v172
    %808 = vmatprep.subr.bf16.mxu0 %v175
    %809 = vmatpush1.bf16.msra.mxu0 %v174
    %810 = vmatprep.subr.bf16.mxu0 %v177
    %811 = vmatpush1.bf16.msra.mxu0 %v176
    %812 = vmatprep.subr.bf16.mxu0 %v179
    %813 = vmatpush1.bf16.msra.mxu0 %v178
    %814 = vmatprep.subr.bf16.mxu0 %v181
    %815 = vmatpush1.bf16.msra.mxu0 %v180
    %816 = vmatprep.subr.bf16.mxu0 0
    %817 = vmatpush1.bf16.msra.mxu0 0
    %818 = vmatprep.subr.bf16.mxu0 0
    %819 = vmatpush1.bf16.msra.mxu0 0
    %820 = vmatprep.subr.bf16.mxu0 0
    %821 = vmatpush1.bf16.msra.mxu0 0
    %822 = vmatprep.subr.bf16.mxu0 0
    %823 = vmatpush1.bf16.msra.mxu0 0
    %824 = vmatprep.subr.bf16.mxu0 0
    %825 = vmatpush1.bf16.msra.mxu0 0
    %826 = vmatprep.subr.bf16.mxu0 0
    %827 = vmatpush1.bf16.msra.mxu0 0
    %828 = vmatprep.subr.bf16.mxu0 0
    %829 = vmatpush1.bf16.msra.mxu0 0
    %830 = vmatprep.subr.bf16.mxu0 0
    %831 = vmatpush1.bf16.msra.mxu0 0
    %832 = vmatprep.mubr.bf16.mxu0 0
    %833 = vmatmul.mubr.bf16.gmra.mrb[0].mxu0 %v799
    %v834 = vpop.f32.mrb[0].mxu0
    %v835 = vadd.f32 0.0, %v834
    %v836 = vpop.f32.mrb[0].mxu0
    %v837 = vadd.f32 0.0, %v836
    %v838 = vpop.f32.mrb[0].mxu0
    %v839 = vpop.f32.mrb[0].mxu0
    %840 = vdwg.mxu0
    %v841 = vadd.f32 %v796, %v835
    %v842 = vxor.u32 %v841, 2147483648
    %v843 = vmul.f32 %v842, 1.442695
    %v844 = vpow.pop %v843
    %v845 = vadd.f32 %v844, 1.0
    %v846 = vrcp.pop %v845
    %v847 = vmul.f32 1.0, %v846
    %v848 = vadd.f32 %v797, %v837
    %v849 = vxor.u32 %v848, 2147483648
    %v850 = vmul.f32 %v849, 1.442695
    %v851 = vpow.pop %v850
    %v852 = vadd.f32 %v851, 1.0
    %v853 = vrcp.pop %v852
    %v854 = vmul.f32 1.0, %v853
    %855 = vmatprep.subr.bf16.mxu0 0
    %856 = vmatpush1.bf16.msra.mxu0 %v285
    %857 = vmatprep.subr.bf16.mxu0 0
    %858 = vmatpush1.bf16.msra.mxu0 %v286
    %859 = vmatprep.subr.bf16.mxu0 0
    %860 = vmatpush1.bf16.msra.mxu0 %v287
    %861 = vmatprep.subr.bf16.mxu0 0
    %862 = vmatpush1.bf16.msra.mxu0 %v288
    %863 = vmatprep.subr.bf16.mxu0 0
    %864 = vmatpush1.bf16.msra.mxu0 %v289
    %865 = vmatprep.subr.bf16.mxu0 0
    %866 = vmatpush1.bf16.msra.mxu0 %v290
    %867 = vmatprep.subr.bf16.mxu0 0
    %868 = vmatpush1.bf16.msra.mxu0 %v291
    %869 = vmatprep.subr.bf16.mxu0 0
    %870 = vmatpush1.bf16.msra.mxu0 %v292
    %871 = vmatprep.subr.bf16.mxu0 0
    %872 = vmatpush1.bf16.msra.mxu0 0
    %873 = vmatprep.subr.bf16.mxu0 0
    %874 = vmatpush1.bf16.msra.mxu0 0
    %875 = vmatprep.subr.bf16.mxu0 0
    %876 = vmatpush1.bf16.msra.mxu0 0
    %877 = vmatprep.subr.bf16.mxu0 0
    %878 = vmatpush1.bf16.msra.mxu0 0
    %879 = vmatprep.subr.bf16.mxu0 0
    %880 = vmatpush1.bf16.msra.mxu0 0
    %881 = vmatprep.subr.bf16.mxu0 0
    %882 = vmatpush1.bf16.msra.mxu0 0
    %883 = vmatprep.subr.bf16.mxu0 0
    %884 = vmatpush1.bf16.msra.mxu0 0
    %885 = vmatprep.subr.bf16.mxu0 0
    %886 = vmatpush1.bf16.msra.mxu0 0
    %887 = vmatprep.mubr.bf16.mxu0 0
    %888 = vmatmul.mubr.bf16.gmra.mrb[0].mxu0 %v799
    %v889 = vpop.f32.mrb[0].mxu0
    %v890 = vadd.f32 %v109, %v889
    %v891 = vpop.f32.mrb[0].mxu0
    %v892 = vpop.f32.mrb[0].mxu0
    %v893 = vpop.f32.mrb[0].mxu0
    %894 = vdwg.mxu0
    %v895 = vmul.f32 %v847, %v890
    %v896 = vadd.f32 %v798, %v895
    %v897 = vtanh.pop %v896
    %v898 = vsub.f32 1.0, %v854
    %v899 = vmul.f32 %v898, %v897
    %v900 = vmul.f32 %v854, %v790
    %v901 = vadd.f32 %v899, %v900
    %s902 = scalar_lea.vmem [#allocation9], 40
    %903 = vst [vmem:[%s902] sm:$0xff] %v901
    %s904 = scalar_lea.vmem [#allocation3], 72
    %v905 = vld [vmem:[%s904] sm:$0xff]
    %v906 = vld [vmem:[%s904 + $0x8] sm:$0xf]
    %v907 = vunpack.c.l.bf16 %v905
    %v908 = vunpack.c.h.bf16 %v905
    %v909 = vunpack.c.l.bf16 %v906
    %v910 = vpack.c.bf16 %v901, %v901
    %911 = vmatprep.subr.bf16.mxu0 %v167
    %912 = vmatpush1.bf16.msra.mxu0 %v166
    %913 = vmatprep.subr.bf16.mxu0 %v169
    %914 = vmatpush1.bf16.msra.mxu0 %v168
    %915 = vmatprep.subr.bf16.mxu0 %v171
    %916 = vmatpush1.bf16.msra.mxu0 %v170
    %917 = vmatprep.subr.bf16.mxu0 %v173
    %918 = vmatpush1.bf16.msra.mxu0 %v172
    %919 = vmatprep.subr.bf16.mxu0 %v175
    %920 = vmatpush1.bf16.msra.mxu0 %v174
    %921 = vmatprep.subr.bf16.mxu0 %v177
    %922 = vmatpush1.bf16.msra.mxu0 %v176
    %923 = vmatprep.subr.bf16.mxu0 %v179
    %924 = vmatpush1.bf16.msra.mxu0 %v178
    %925 = vmatprep.subr.bf16.mxu0 %v181
    %926 = vmatpush1.bf16.msra.mxu0 %v180
    %927 = vmatprep.subr.bf16.mxu0 0
    %928 = vmatpush1.bf16.msra.mxu0 0
    %929 = vmatprep.subr.bf16.mxu0 0
    %930 = vmatpush1.bf16.msra.mxu0 0
    %931 = vmatprep.subr.bf16.mxu0 0
    %932 = vmatpush1.bf16.msra.mxu0 0
    %933 = vmatprep.subr.bf16.mxu0 0
    %934 = vmatpush1.bf16.msra.mxu0 0
    %935 = vmatprep.subr.bf16.mxu0 0
    %936 = vmatpush1.bf16.msra.mxu0 0
    %937 = vmatprep.subr.bf16.mxu0 0
    %938 = vmatpush1.bf16.msra.mxu0 0
    %939 = vmatprep.subr.bf16.mxu0 0
    %940 = vmatpush1.bf16.msra.mxu0 0
    %941 = vmatprep.subr.bf16.mxu0 0
    %942 = vmatpush1.bf16.msra.mxu0 0
    %943 = vmatprep.mubr.bf16.mxu0 0
    %944 = vmatmul.mubr.bf16.gmra.mrb[0].mxu0 %v910
    %v945 = vpop.f32.mrb[0].mxu0
    %v946 = vadd.f32 0.0, %v945
    %v947 = vpop.f32.mrb[0].mxu0
    %v948 = vadd.f32 0.0, %v947
    %v949 = vpop.f32.mrb[0].mxu0
    %v950 = vpop.f32.mrb[0].mxu0
    %951 = vdwg.mxu0
    %v952 = vadd.f32 %v907, %v946
    %v953 = vxor.u32 %v952, 2147483648
    %v954 = vmul.f32 %v953, 1.442695
    %v955 = vpow.pop %v954
    %v956 = vadd.f32 %v955, 1.0
    %v957 = vrcp.pop %v956
    %v958 = vmul.f32 1.0, %v957
    %v959 = vadd.f32 %v908, %v948
    %v960 = vxor.u32 %v959, 2147483648
    %v961 = vmul.f32 %v960, 1.442695
    %v962 = vpow.pop %v961
    %v963 = vadd.f32 %v962, 1.0
    %v964 = vrcp.pop %v963
    %v965 = vmul.f32 1.0, %v964
    %966 = vmatprep.subr.bf16.mxu0 0
    %967 = vmatpush1.bf16.msra.mxu0 %v285
    %968 = vmatprep.subr.bf16.mxu0 0
    %969 = vmatpush1.bf16.msra.mxu0 %v286
    %970 = vmatprep.subr.bf16.mxu0 0
    %971 = vmatpush1.bf16.msra.mxu0 %v287
    %972 = vmatprep.subr.bf16.mxu0 0
    %973 = vmatpush1.bf16.msra.mxu0 %v288
    %974 = vmatprep.subr.bf16.mxu0 0
    %975 = vmatpush1.bf16.msra.mxu0 %v289
    %976 = vmatprep.subr.bf16.mxu0 0
    %977 = vmatpush1.bf16.msra.mxu0 %v290
    %978 = vmatprep.subr.bf16.mxu0 0
    %979 = vmatpush1.bf16.msra.mxu0 %v291
    %980 = vmatprep.subr.bf16.mxu0 0
    %981 = vmatpush1.bf16.msra.mxu0 %v292
    %982 = vmatprep.subr.bf16.mxu0 0
    %983 = vmatpush1.bf16.msra.mxu0 0
    %984 = vmatprep.subr.bf16.mxu0 0
    %985 = vmatpush1.bf16.msra.mxu0 0
    %986 = vmatprep.subr.bf16.mxu0 0
    %987 = vmatpush1.bf16.msra.mxu0 0
    %988 = vmatprep.subr.bf16.mxu0 0
    %989 = vmatpush1.bf16.msra.mxu0 0
    %990 = vmatprep.subr.bf16.mxu0 0
    %991 = vmatpush1.bf16.msra.mxu0 0
    %992 = vmatprep.subr.bf16.mxu0 0
    %993 = vmatpush1.bf16.msra.mxu0 0
    %994 = vmatprep.subr.bf16.mxu0 0
    %995 = vmatpush1.bf16.msra.mxu0 0
    %996 = vmatprep.subr.bf16.mxu0 0
    %997 = vmatpush1.bf16.msra.mxu0 0
    %998 = vmatprep.mubr.bf16.mxu0 0
    %999 = vmatmul.mubr.bf16.gmra.mrb[0].mxu0 %v910
    %v1000 = vpop.f32.mrb[0].mxu0
    %v1001 = vadd.f32 %v109, %v1000
    %v1002 = vpop.f32.mrb[0].mxu0
    %v1003 = vpop.f32.mrb[0].mxu0
    %v1004 = vpop.f32.mrb[0].mxu0
    %1005 = vdwg.mxu0
    %v1006 = vmul.f32 %v958, %v1001
    %v1007 = vadd.f32 %v909, %v1006
    %v1008 = vtanh.pop %v1007
    %v1009 = vsub.f32 1.0, %v965
    %v1010 = vmul.f32 %v1009, %v1008
    %v1011 = vmul.f32 %v965, %v901
    %v1012 = vadd.f32 %v1010, %v1011
    %s1013 = scalar_lea.vmem [#allocation9], 48
    %1014 = vst [vmem:[%s1013] sm:$0xff] %v1012
    %s1015 = scalar_lea.vmem [#allocation3], 84
    %v1016 = vld [vmem:[%s1015] sm:$0xff]
    %v1017 = vld [vmem:[%s1015 + $0x8] sm:$0xf]
    %v1018 = vunpack.c.l.bf16 %v1016
    %v1019 = vunpack.c.h.bf16 %v1016
    %v1020 = vunpack.c.l.bf16 %v1017
    %v1021 = vpack.c.bf16 %v1012, %v1012
    %1022 = vmatprep.subr.bf16.mxu0 %v167
    %1023 = vmatpush1.bf16.msra.mxu0 %v166
    %1024 = vmatprep.subr.bf16.mxu0 %v169
    %1025 = vmatpush1.bf16.msra.mxu0 %v168
    %1026 = vmatprep.subr.bf16.mxu0 %v171
    %1027 = vmatpush1.bf16.msra.mxu0 %v170
    %1028 = vmatprep.subr.bf16.mxu0 %v173
    %1029 = vmatpush1.bf16.msra.mxu0 %v172
    %1030 = vmatprep.subr.bf16.mxu0 %v175
    %1031 = vmatpush1.bf16.msra.mxu0 %v174
    %1032 = vmatprep.subr.bf16.mxu0 %v177
    %1033 = vmatpush1.bf16.msra.mxu0 %v176
    %1034 = vmatprep.subr.bf16.mxu0 %v179
    %1035 = vmatpush1.bf16.msra.mxu0 %v178
    %1036 = vmatprep.subr.bf16.mxu0 %v181
    %1037 = vmatpush1.bf16.msra.mxu0 %v180
    %1038 = vmatprep.subr.bf16.mxu0 0
    %1039 = vmatpush1.bf16.msra.mxu0 0
    %1040 = vmatprep.subr.bf16.mxu0 0
    %1041 = vmatpush1.bf16.msra.mxu0 0
    %1042 = vmatprep.subr.bf16.mxu0 0
    %1043 = vmatpush1.bf16.msra.mxu0 0
    %1044 = vmatprep.subr.bf16.mxu0 0
    %1045 = vmatpush1.bf16.msra.mxu0 0
    %1046 = vmatprep.subr.bf16.mxu0 0
    %1047 = vmatpush1.bf16.msra.mxu0 0
    %1048 = vmatprep.subr.bf16.mxu0 0
    %1049 = vmatpush1.bf16.msra.mxu0 0
    %1050 = vmatprep.subr.bf16.mxu0 0
    %1051 = vmatpush1.bf16.msra.mxu0 0
    %1052 = vmatprep.subr.bf16.mxu0 0
    %1053 = vmatpush1.bf16.msra.mxu0 0
    %1054 = vmatprep.mubr.bf16.mxu0 0
    %1055 = vmatmul.mubr.bf16.gmra.mrb[0].mxu0 %v1021
    %v1056 = vpop.f32.mrb[0].mxu0
    %v1057 = vadd.f32 0.0, %v1056
    %v1058 = vpop.f32.mrb[0].mxu0
    %v1059 = vadd.f32 0.0, %v1058
    %v1060 = vpop.f32.mrb[0].mxu0
    %v1061 = vpop.f32.mrb[0].mxu0
    %1062 = vdwg.mxu0
    %v1063 = vadd.f32 %v1018, %v1057
    %v1064 = vxor.u32 %v1063, 2147483648
    %v1065 = vmul.f32 %v1064, 1.442695
    %v1066 = vpow.pop %v1065
    %v1067 = vadd.f32 %v1066, 1.0
    %v1068 = vrcp.pop %v1067
    %v1069 = vmul.f32 1.0, %v1068
    %v1070 = vadd.f32 %v1019, %v1059
    %v1071 = vxor.u32 %v1070, 2147483648
    %v1072 = vmul.f32 %v1071, 1.442695
    %v1073 = vpow.pop %v1072
    %v1074 = vadd.f32 %v1073, 1.0
    %v1075 = vrcp.pop %v1074
    %v1076 = vmul.f32 1.0, %v1075
    %1077 = vmatprep.subr.bf16.mxu0 0
    %1078 = vmatpush1.bf16.msra.mxu0 %v285
    %1079 = vmatprep.subr.bf16.mxu0 0
    %1080 = vmatpush1.bf16.msra.mxu0 %v286
    %1081 = vmatprep.subr.bf16.mxu0 0
    %1082 = vmatpush1.bf16.msra.mxu0 %v287
    %1083 = vmatprep.subr.bf16.mxu0 0
    %1084 = vmatpush1.bf16.msra.mxu0 %v288
    %1085 = vmatprep.subr.bf16.mxu0 0
    %1086 = vmatpush1.bf16.msra.mxu0 %v289
    %1087 = vmatprep.subr.bf16.mxu0 0
    %1088 = vmatpush1.bf16.msra.mxu0 %v290
    %1089 = vmatprep.subr.bf16.mxu0 0
    %1090 = vmatpush1.bf16.msra.mxu0 %v291
    %1091 = vmatprep.subr.bf16.mxu0 0
    %1092 = vmatpush1.bf16.msra.mxu0 %v292
    %1093 = vmatprep.subr.bf16.mxu0 0
    %1094 = vmatpush1.bf16.msra.mxu0 0
    %1095 = vmatprep.subr.bf16.mxu0 0
    %1096 = vmatpush1.bf16.msra.mxu0 0
    %1097 = vmatprep.subr.bf16.mxu0 0
    %1098 = vmatpush1.bf16.msra.mxu0 0
    %1099 = vmatprep.subr.bf16.mxu0 0
    %1100 = vmatpush1.bf16.msra.mxu0 0
    %1101 = vmatprep.subr.bf16.mxu0 0
    %1102 = vmatpush1.bf16.msra.mxu0 0
    %1103 = vmatprep.subr.bf16.mxu0 0
    %1104 = vmatpush1.bf16.msra.mxu0 0
    %1105 = vmatprep.subr.bf16.mxu0 0
    %1106 = vmatpush1.bf16.msra.mxu0 0
    %1107 = vmatprep.subr.bf16.mxu0 0
    %1108 = vmatpush1.bf16.msra.mxu0 0
    %1109 = vmatprep.mubr.bf16.mxu0 0
    %1110 = vmatmul.mubr.bf16.gmra.mrb[0].mxu0 %v1021
    %v1111 = vpop.f32.mrb[0].mxu0
    %v1112 = vadd.f32 %v109, %v1111
    %v1113 = vpop.f32.mrb[0].mxu0
    %v1114 = vpop.f32.mrb[0].mxu0
    %v1115 = vpop.f32.mrb[0].mxu0
    %1116 = vdwg.mxu0
    %v1117 = vmul.f32 %v1069, %v1112
    %v1118 = vadd.f32 %v1020, %v1117
    %v1119 = vtanh.pop %v1118
    %v1120 = vsub.f32 1.0, %v1076
    %v1121 = vmul.f32 %v1120, %v1119
    %v1122 = vmul.f32 %v1076, %v1012
    %v1123 = vadd.f32 %v1121, %v1122
    %s1124 = scalar_lea.vmem [#allocation9], 56
    %1125 = vst [vmem:[%s1124] sm:$0xff] %v1123
    %1126 = vst [vmem:[#allocation2] sm:$0xff] %v1123
    // Predicated region
    $region38: #{tpu_custom_call.1} parent=1 // pred_check
      %p1127 = pneg %p66
    $region39: #{tpu_custom_call.1} parent=1 // pred_check_branch
      %1129 = sbr.rel (%p1127) target = $region41
    $region40: #{tpu_custom_call.1} parent=1 // pred_region
      %1130 = vst [vmem:[#allocation10] sm:$0xff] %v1123
    $region41: #{tpu_custom_call.1} parent=1 // pred_fallthru
      _
    // Predicated region
    $region42: #{tpu_custom_call.1} parent=1 // pred_check
      _
    $region43: #{tpu_custom_call.1} parent=1 // pred_check_branch
      %1132 = sbr.rel (0) target = $region45
    $region44: #{tpu_custom_call.1} parent=1 // pred_region
      %s1134 = ssub.s32 1024, 1024
      %1135 = vsyncadd [#allocation5], %s1134
      %s1136 = sshll.u32 [#allocation9], 4
      %s1137 = int_to_ptr.vmem [resolvable:$true] %s1136
      %1142 = dma.vmem_to_hbm [thread:$0]  %s1137, 1024, %s5, [#allocation5], 128, 128, 8
    $region45: #{tpu_custom_call.1} parent=1 // pred_fallthru
      _
    // Predicated region
    $region46: #{tpu_custom_call.1} parent=1 // pred_check
      _
    $region47: #{tpu_custom_call.1} parent=1 // pred_check_branch
      %1144 = sbr.rel (0) target = $region49
    $region48: #{tpu_custom_call.1} parent=1 // pred_region
      %s1146 = ssub.s32 128, 128
      %1147 = vsyncadd [#allocation11], %s1146
      %s1149 = sshll.u32 [#allocation10], 4
      %s1150 = int_to_ptr.vmem [resolvable:$true] %s1149
      %1152 = dma.vmem_to_hbm [thread:$0]  %s1150, 128, %s6, [#allocation11]
    $region49: #{tpu_custom_call.1} parent=1 // pred_fallthru
      _
    // Predicated region
    $region50: #{tpu_custom_call.1} parent=1 // pred_check
      _
    $region51: #{tpu_custom_call.1} parent=1 // pred_check_branch
      %1154 = sbr.rel (0) target = $region53
    $region52: #{tpu_custom_call.1} parent=1 // pred_region
      %1155 = dma.done [#allocation5], 1024
    $region53: #{tpu_custom_call.1} parent=1 // pred_fallthru
      _
    // Predicated region
    $region54: #{tpu_custom_call.1} parent=1 // pred_check
      _
    $region55: #{tpu_custom_call.1} parent=1 // pred_check_branch
      %1157 = sbr.rel (0) target = $region57
    $region56: #{tpu_custom_call.1} parent=1 // pred_region
      %1158 = dma.done [#allocation11], 128
    $region57: #{tpu_custom_call.1} parent=1 // pred_fallthru
      _
    %1159 = vsyncpa [#allocation4], 1
    %1160 = vsyncpa [#allocation7], 1
    %1161 = vsyncpa [#allocation5], 1
    %1162 = vsyncpa [#allocation11], 1

</llo_original>
